<compile_context>
chip_gen: v7x
topology: tpu7x:2x2x1
jax: 0.10.0
libtpu: 0.0.40
codegen_flags: <defaults>
</compile_context>

<pallas_src>
import functools
import math

import jax
import jax.numpy as jnp
from jax.experimental import pallas as pl
from jax.experimental.pallas import tpu as pltpu


def _up_block_kernel(xx_ref, xs_ref, w1_ref, w2_ref, pv_ref, o_ref,
                     s1_ref, s2_ref, a1pad_ref,
                     *, Nb, Cx, Cs, Co, H, W, Wp, L, M, KH, KW, eps, slope):
    """Processes Nb images per grid step.

    xx_ref:    (Nb, Cx, L)      zero-padded, flattened upsampled input (L = Hp*Wp)
    xs_ref:    (Nb, Cs, L)      zero-padded, flattened skip input
    w1_ref:    (Co, T*(Cx+Cs))  layer-1 weights, taps stacked on the contraction axis
    w2_ref:    (Co, T*Co)       layer-2 weights, taps stacked on the contraction axis
    pv_ref:    (Co, 8) f32      packed [b1, g1, bt1, b2, g2, bt2, 0, 0]
    o_ref:     (Nb, Co, M) f32  output, flat (H, Wp) spatial on lanes (M = H*Wp)
    s1_ref:    (T*(Cx+Cs), M)   VMEM scratch: stacked layer-1 conv operand
    s2_ref:    (T*Co, M)        VMEM scratch: stacked layer-2 conv operand
    a1pad_ref: (Co, L)          VMEM scratch: re-padded layer-1 activation
    """
    T = KH * KW
    ph, pw = KH // 2, KW // 2
    off0 = ph * Wp + pw
    n_valid = float(H * W)

    # Validity mask over flat columns (column c of each Wp-wide row is valid iff c < W).
    col = jax.lax.broadcasted_iota(jnp.int32, (1, M), 1)
    mask = (col % Wp < W).astype(jnp.float32)                       # (1, M)

    pv = pv_ref[...]                                                # (Co, 8)
    b1, g1, bt1 = pv[:, 0:1], pv[:, 1:2], pv[:, 2:3]
    b2, g2, bt2 = pv[:, 3:4], pv[:, 4:5], pv[:, 5:6]
    w1 = w1_ref[...]
    w2 = w2_ref[...]

    def inorm_lrelu(y, bias, gamma, beta):
        # conv bias + InstanceNorm2d (affine, biased variance over valid pixels) + LeakyReLU.
        y = y + bias
        mean = jnp.sum(y * mask, axis=1, keepdims=True) / n_valid   # (Co, 1)
        d = (y - mean) * mask
        var = jnp.sum(d * d, axis=1, keepdims=True) / n_valid
        yn = (y - mean) * jax.lax.rsqrt(var + eps)
        yn = yn * gamma + beta
        return jnp.where(yn >= 0, yn, slope * yn)

    for nb in range(Nb):
        # ---- layer 1: stack the tap windows of BOTH inputs along the contraction axis.
        #      (concat([x_up, skip], C) is fused by splitting the weights in the wrapper.)
        for kh in range(KH):
            for kw in range(KW):
                t = kh * KW + kw
                off = kh * Wp + kw
                s1_ref[t * Cx:(t + 1) * Cx, :] = xx_ref[nb, :, off:off + M]
                s1_ref[T * Cx + t * Cs:T * Cx + (t + 1) * Cs, :] = xs_ref[nb, :, off:off + M]
        y1 = jnp.dot(w1, s1_ref[...], preferred_element_type=jnp.float32)   # (Co, M)
        a1 = inorm_lrelu(y1, b1, g1, bt1)

        # ---- re-pad the layer-1 activation into a VMEM scratch (never touches HBM).
        a1pad_ref[...] = jnp.zeros(a1pad_ref.shape, a1pad_ref.dtype)
        a1pad_ref[:, off0:off0 + M] = (a1 * mask).astype(a1pad_ref.dtype)

        # ---- layer 2: stack taps from the padded-activation scratch.
        for kh in range(KH):
            for kw in range(KW):
                t = kh * KW + kw
                off = kh * Wp + kw
                s2_ref[t * Co:(t + 1) * Co, :] = a1pad_ref[:, off:off + M]
        y2 = jnp.dot(w2, s2_ref[...], preferred_element_type=jnp.float32)   # (Co, M)
        a2 = inorm_lrelu(y2, b2, g2, bt2)

        # Pad columns hold finite garbage; the wrapper slices them off, so no final mask.
        o_ref[nb] = a2.astype(o_ref.dtype)


def _stack_taps(w):
    """PyTorch conv weight (Co, Ci, KH, KW) -> (Co, KH*KW*Ci), rows tap-major / channel-minor."""
    Co, Ci, KH, KW = w.shape
    return jnp.transpose(w, (0, 2, 3, 1)).reshape(Co, KH * KW * Ci)


def up_block_forward(x_nchw, skip_nchw, params, *, eps=1e-5, slope=0.01):
    """UpBlock.forward: bilinear upsample x to skip's spatial size, channel concat,
    then ConvBlock (2x conv / InstanceNorm2d / LeakyReLU).  NCHW in, NCHW out."""
    N, Cx, Hx, Wx = x_nchw.shape
    _, Cs, H, W = skip_nchw.shape
    x_nchw = x_nchw.astype(jnp.float32)
    skip_nchw = skip_nchw.astype(jnp.float32)
    if (Hx, Wx) != (H, W):
        # F.interpolate(mode='bilinear', align_corners=False) uses half-pixel centers;
        # jax.image.resize('bilinear') matches for upsampling.
        x_nchw = jax.image.resize(x_nchw, (N, Cx, H, W), method='bilinear')

    l1, l2 = params
    Co, Cin1, KH, KW = l1['w'].shape
    assert Cin1 == Cx + Cs, (Cin1, Cx, Cs)
    assert KH % 2 == 1 and KW % 2 == 1, "odd kernel sizes only"
    ph, pw = KH // 2, KW // 2
    T = KH * KW

    # Round padded row width Wp so M = H*Wp is a multiple of 128 (lane-dense vregs,
    # unmasked stores) unless that would more than double Wp.
    Wp_min = W + 2 * pw
    step = 128 // math.gcd(H, 128)
    Wp = ((Wp_min + step - 1) // step) * step
    if Wp > 2 * Wp_min:
        Wp = Wp_min
    M = H * Wp
    Hp = H + 2 * ph + 1              # one extra zero row keeps every tap slice in-bounds
    L = Hp * Wp

    # bf16 matmul operands (MXU-native); fall back to f32 if channel counts would force
    # odd packed-sublane offsets in the stacked-operand scratch stores.
    op_dtype = jnp.bfloat16 if (Cx % 2 == 0 and Cs % 2 == 0 and Co % 2 == 0) else jnp.float32

    def pad_flat(a):                 # (N, C, H, W) -> (N, C, L), zero halo, flat (Hp, Wp)
        a = jnp.pad(a, ((0, 0), (0, 0), (ph, ph + 1), (pw, Wp - W - pw)))
        return a.reshape(N, a.shape[1], L).astype(op_dtype)

    xx = pad_flat(x_nchw)
    xs = pad_flat(skip_nchw)

    w1 = l1['w'].astype(jnp.float32)
    w1_stk = jnp.concatenate([_stack_taps(w1[:, :Cx]), _stack_taps(w1[:, Cx:])],
                             axis=1).astype(op_dtype)                # (Co, T*(Cx+Cs))
    w2_stk = _stack_taps(l2['w'].astype(jnp.float32)).astype(op_dtype)  # (Co, T*Co)

    pvec = jnp.stack([l1['b'], l1['gamma'], l1['beta'],
                      l2['b'], l2['gamma'], l2['beta']], axis=1).astype(jnp.float32)
    pvec = jnp.pad(pvec, ((0, 0), (0, 2)))                           # (Co, 8)

    # A few images per grid step (amortize pipeline overhead) while keeping the parallel
    # grid extent >= 2 so both v7x TensorCores get work.
    Nb = 1
    for cand in (4, 2):
        if N % cand == 0 and N // cand >= 2:
            Nb = cand
            break

    kernel = functools.partial(
        _up_block_kernel, Nb=Nb, Cx=Cx, Cs=Cs, Co=Co, H=H, W=W, Wp=Wp, L=L, M=M,
        KH=KH, KW=KW, eps=eps, slope=slope)

    out_flat = pl.pallas_call(
        kernel,
        out_shape=jax.ShapeDtypeStruct((N, Co, M), jnp.float32),
        grid_spec=pltpu.PrefetchScalarGridSpec(
            num_scalar_prefetch=0,
            grid=(N // Nb,),
            in_specs=[
                pl.BlockSpec((Nb, Cx, L), lambda n: (n, 0, 0)),
                pl.BlockSpec((Nb, Cs, L), lambda n: (n, 0, 0)),
                pl.BlockSpec((Co, T * (Cx + Cs)), lambda n: (0, 0)),
                pl.BlockSpec((Co, T * Co), lambda n: (0, 0)),
                pl.BlockSpec((Co, 8), lambda n: (0, 0)),
            ],
            out_specs=pl.BlockSpec((Nb, Co, M), lambda n: (n, 0, 0)),
            scratch_shapes=[
                pltpu.VMEM((T * (Cx + Cs), M), op_dtype),
                pltpu.VMEM((T * Co, M), op_dtype),
                pltpu.VMEM((Co, L), op_dtype),
            ]),
        compiler_params=pltpu.CompilerParams(
            dimension_semantics=("parallel",),
            vmem_limit_bytes=64 * 1024 * 1024),
    )(xx, xs, w1_stk, w2_stk, pvec)

    # (N, Co, H, Wp) -> drop pad columns; result is already NCHW (no transposes anywhere).
    return out_flat.reshape(N, Co, H, Wp)[:, :, :, :W]
    # TODO(synk): SpatialDropout2d / dropout_op are inactive with the module's default
    # config (rate 0 / None, eval mode), so they are intentionally omitted.


def make_params(key, in_channels, out_channels, kernel_size, n_convs=2):
    """Deterministic parameters matching ConvBlock's layer shapes (PyTorch layout)."""
    params = []
    cin = in_channels
    for _ in range(n_convs):
        key, kw_, kb_, kg_, kbt_ = jax.random.split(key, 5)
        w = jax.random.normal(
            kw_, (out_channels, cin, kernel_size, kernel_size), jnp.float32) * 0.1
        b = jax.random.normal(kb_, (out_channels,), jnp.float32) * 0.05
        gamma = 1.0 + 0.1 * jax.random.normal(kg_, (out_channels,), jnp.float32)
        beta = 0.05 * jax.random.normal(kbt_, (out_channels,), jnp.float32)
        params.append({'w': w, 'b': b, 'gamma': gamma, 'beta': beta})
        cin = out_channels
    return params


if __name__ == "__main__":
    key = jax.random.PRNGKey(0)
    kx, kskip, kp = jax.random.split(key, 3)

    # UpBlock(in_channels=4, skip_channels=4, out_channels=4, kernel_size=3)
    in_channels, skip_channels, out_channels, ksize = 4, 4, 4, 3

    # x comes from the coarser level (exercises the bilinear-upsample path).
    x = jax.random.normal(kx, (2, in_channels, 8, 8), dtype=jnp.float32)
    skip = jax.random.normal(kskip, (2, skip_channels, 16, 16), dtype=jnp.float32)

    params = make_params(kp, in_channels + skip_channels, out_channels, ksize,
                         n_convs=2)

    fwd = jax.jit(up_block_forward)
    out = fwd(x, skip, params)
    out = jax.block_until_ready(out)

    assert out.shape == (2, out_channels, 16, 16), out.shape
    assert bool(jnp.all(jnp.isfinite(out)))
    print("KERNEL_OK")
</pallas_src>

<mosaic_0001>
module attributes {stable_mosaic.version = 11 : i64} {
  func.func @_up_block_kernel(%arg0: i32, %arg1: memref<1x4x456xbf16, #tpu.memory_space<vmem>>, %arg2: memref<1x4x456xbf16, #tpu.memory_space<vmem>>, %arg3: memref<4x72xbf16, #tpu.memory_space<vmem>>, %arg4: memref<4x36xbf16, #tpu.memory_space<vmem>>, %arg5: memref<4x8xf32, #tpu.memory_space<vmem>>, %arg6: memref<1x4x384xf32, #tpu.memory_space<vmem>>, %arg7: memref<72x384xbf16, #tpu.memory_space<vmem>>, %arg8: memref<36x384xbf16, #tpu.memory_space<vmem>>, %arg9: memref<4x456xbf16, #tpu.memory_space<vmem>>) attributes {dimension_semantics = [#tpu.dimension_semantics<parallel>], iteration_bounds = array<i64: 2>, scalar_prefetch = 0 : i64, scratch_operands = 3 : i64, tpu.core_type = #tpu.core_type<tc>, window_params = [{transform_indices = @transform_0, window_bounds = array<i64: 1, 4, 456>}, {transform_indices = @transform_1, window_bounds = array<i64: 1, 4, 456>}, {pipeline_mode = #tpu.pipeline_mode<synchronous>, transform_indices = @transform_2, window_bounds = array<i64: 4, 72>}, {pipeline_mode = #tpu.pipeline_mode<synchronous>, transform_indices = @transform_3, window_bounds = array<i64: 4, 36>}, {pipeline_mode = #tpu.pipeline_mode<synchronous>, transform_indices = @transform_4, window_bounds = array<i64: 4, 8>}, {transform_indices = @transform_5, window_bounds = array<i64: 1, 4, 384>}]} {
    %0 = tpu.iota {dimensions = array<i32: 1>} : vector<1x384xi32>
    %c24_i32 = arith.constant 24 : i32
    %c0_i32 = arith.constant 0 : i32
    %1 = arith.cmpi eq, %c24_i32, %c0_i32 : i32
    %c1_i32 = arith.constant 1 : i32
    %2 = arith.select %1, %c1_i32, %c24_i32 : i32
    %3 = vector.broadcast %2 : i32 to vector<1x384xi32>
    %4 = arith.remsi %0, %3 : vector<1x384xi32>
    %c0_i32_0 = arith.constant 0 : i32
    %5 = vector.broadcast %c0_i32_0 : i32 to vector<1x384xi32>
    %6 = arith.cmpi ne, %4, %5 : vector<1x384xi32>
    %c0_i32_1 = arith.constant 0 : i32
    %7 = vector.broadcast %c0_i32_1 : i32 to vector<1x384xi32>
    %8 = arith.cmpi slt, %4, %7 : vector<1x384xi32>
    %c0_i32_2 = arith.constant 0 : i32
    %9 = arith.cmpi slt, %2, %c0_i32_2 : i32
    %10 = vector.broadcast %9 : i1 to vector<1x384xi1>
    %11 = vector.broadcast %10 : vector<1x384xi1> to vector<1x384xi1>
    %12 = arith.xori %8, %11 : vector<1x384xi1>
    %13 = arith.andi %12, %6 : vector<1x384xi1>
    %14 = vector.broadcast %2 : i32 to vector<1x384xi32>
    %15 = arith.addi %4, %14 : vector<1x384xi32>
    %16 = arith.select %13, %15, %4 : vector<1x384xi1>, vector<1x384xi32>
    %c16_i32 = arith.constant 16 : i32
    %17 = vector.broadcast %c16_i32 : i32 to vector<1x384xi32>
    %18 = arith.cmpi slt, %16, %17 : vector<1x384xi32>
    %19 = arith.extui %18 : vector<1x384xi1> to vector<1x384xi32>
    %20 = arith.sitofp %19 : vector<1x384xi32> to vector<1x384xf32>
    %c0 = arith.constant 0 : index
    %c0_3 = arith.constant 0 : index
    %21 = vector.load %arg5[%c0, %c0_3] : memref<4x8xf32, #tpu.memory_space<vmem>>, vector<4x8xf32>
    %22 = vector.extract_strided_slice %21 {offsets = [0, 0], sizes = [4, 1], strides = [1, 1]} : vector<4x8xf32> to vector<4x1xf32>
    %23 = vector.extract_strided_slice %21 {offsets = [0, 1], sizes = [4, 1], strides = [1, 1]} : vector<4x8xf32> to vector<4x1xf32>
    %24 = vector.extract_strided_slice %21 {offsets = [0, 2], sizes = [4, 1], strides = [1, 1]} : vector<4x8xf32> to vector<4x1xf32>
    %25 = vector.extract_strided_slice %21 {offsets = [0, 3], sizes = [4, 1], strides = [1, 1]} : vector<4x8xf32> to vector<4x1xf32>
    %26 = vector.extract_strided_slice %21 {offsets = [0, 4], sizes = [4, 1], strides = [1, 1]} : vector<4x8xf32> to vector<4x1xf32>
    %27 = vector.extract_strided_slice %21 {offsets = [0, 5], sizes = [4, 1], strides = [1, 1]} : vector<4x8xf32> to vector<4x1xf32>
    %c0_4 = arith.constant 0 : index
    %c0_5 = arith.constant 0 : index
    %28 = vector.load %arg3[%c0_4, %c0_5] : memref<4x72xbf16, #tpu.memory_space<vmem>>, vector<4x72xbf16>
    %c0_6 = arith.constant 0 : index
    %c0_7 = arith.constant 0 : index
    %29 = vector.load %arg4[%c0_6, %c0_7] : memref<4x36xbf16, #tpu.memory_space<vmem>>, vector<4x36xbf16>
    %c0_8 = arith.constant 0 : index
    %c0_9 = arith.constant 0 : index
    %c0_10 = arith.constant 0 : index
    %30 = vector.load %arg1[%c0_8, %c0_9, %c0_10] : memref<1x4x456xbf16, #tpu.memory_space<vmem>>, vector<1x4x384xbf16>
    %31 = vector.shape_cast %30 : vector<1x4x384xbf16> to vector<4x384xbf16>
    %c0_11 = arith.constant 0 : index
    %c0_12 = arith.constant 0 : index
    %32 = vector.load %arg7[%c0_11, %c0_12] : memref<72x384xbf16, #tpu.memory_space<vmem>>, vector<4x384xbf16>
    tpu.vector_store %arg7[%c0_11, %c0_12], %31 {strides = array<i32>} : memref<72x384xbf16, #tpu.memory_space<vmem>>, vector<4x384xbf16>,
    %c0_13 = arith.constant 0 : index
    %c0_14 = arith.constant 0 : index
    %c0_15 = arith.constant 0 : index
    %33 = vector.load %arg2[%c0_13, %c0_14, %c0_15] : memref<1x4x456xbf16, #tpu.memory_space<vmem>>, vector<1x4x384xbf16>
    %34 = vector.shape_cast %33 : vector<1x4x384xbf16> to vector<4x384xbf16>
    %c36 = arith.constant 36 : index
    %c0_16 = arith.constant 0 : index
    %35 = vector.load %arg7[%c36, %c0_16] : memref<72x384xbf16, #tpu.memory_space<vmem>>, vector<4x384xbf16>
    tpu.vector_store %arg7[%c36, %c0_16], %34 {strides = array<i32>} : memref<72x384xbf16, #tpu.memory_space<vmem>>, vector<4x384xbf16>,
    %c0_17 = arith.constant 0 : index
    %c0_18 = arith.constant 0 : index
    %c1 = arith.constant 1 : index
    %36 = vector.load %arg1[%c0_17, %c0_18, %c1] : memref<1x4x456xbf16, #tpu.memory_space<vmem>>, vector<1x4x384xbf16>
    %37 = vector.shape_cast %36 : vector<1x4x384xbf16> to vector<4x384xbf16>
    %c4 = arith.constant 4 : index
    %c0_19 = arith.constant 0 : index
    %38 = vector.load %arg7[%c4, %c0_19] : memref<72x384xbf16, #tpu.memory_space<vmem>>, vector<4x384xbf16>
    tpu.vector_store %arg7[%c4, %c0_19], %37 {strides = array<i32>} : memref<72x384xbf16, #tpu.memory_space<vmem>>, vector<4x384xbf16>,
    %c0_20 = arith.constant 0 : index
    %c0_21 = arith.constant 0 : index
    %c1_22 = arith.constant 1 : index
    %39 = vector.load %arg2[%c0_20, %c0_21, %c1_22] : memref<1x4x456xbf16, #tpu.memory_space<vmem>>, vector<1x4x384xbf16>
    %40 = vector.shape_cast %39 : vector<1x4x384xbf16> to vector<4x384xbf16>
    %c40 = arith.constant 40 : index
    %c0_23 = arith.constant 0 : index
    %41 = vector.load %arg7[%c40, %c0_23] : memref<72x384xbf16, #tpu.memory_space<vmem>>, vector<4x384xbf16>
    tpu.vector_store %arg7[%c40, %c0_23], %40 {strides = array<i32>} : memref<72x384xbf16, #tpu.memory_space<vmem>>, vector<4x384xbf16>,
    %c0_24 = arith.constant 0 : index
    %c0_25 = arith.constant 0 : index
    %c2 = arith.constant 2 : index
    %42 = vector.load %arg1[%c0_24, %c0_25, %c2] : memref<1x4x456xbf16, #tpu.memory_space<vmem>>, vector<1x4x384xbf16>
    %43 = vector.shape_cast %42 : vector<1x4x384xbf16> to vector<4x384xbf16>
    %c8 = arith.constant 8 : index
    %c0_26 = arith.constant 0 : index
    %44 = vector.load %arg7[%c8, %c0_26] : memref<72x384xbf16, #tpu.memory_space<vmem>>, vector<4x384xbf16>
    tpu.vector_store %arg7[%c8, %c0_26], %43 {strides = array<i32>} : memref<72x384xbf16, #tpu.memory_space<vmem>>, vector<4x384xbf16>,
    %c0_27 = arith.constant 0 : index
    %c0_28 = arith.constant 0 : index
    %c2_29 = arith.constant 2 : index
    %45 = vector.load %arg2[%c0_27, %c0_28, %c2_29] : memref<1x4x456xbf16, #tpu.memory_space<vmem>>, vector<1x4x384xbf16>
    %46 = vector.shape_cast %45 : vector<1x4x384xbf16> to vector<4x384xbf16>
    %c44 = arith.constant 44 : index
    %c0_30 = arith.constant 0 : index
    %47 = vector.load %arg7[%c44, %c0_30] : memref<72x384xbf16, #tpu.memory_space<vmem>>, vector<4x384xbf16>
    tpu.vector_store %arg7[%c44, %c0_30], %46 {strides = array<i32>} : memref<72x384xbf16, #tpu.memory_space<vmem>>, vector<4x384xbf16>,
    %c0_31 = arith.constant 0 : index
    %c0_32 = arith.constant 0 : index
    %c24 = arith.constant 24 : index
    %48 = vector.load %arg1[%c0_31, %c0_32, %c24] : memref<1x4x456xbf16, #tpu.memory_space<vmem>>, vector<1x4x384xbf16>
    %49 = vector.shape_cast %48 : vector<1x4x384xbf16> to vector<4x384xbf16>
    %c12 = arith.constant 12 : index
    %c0_33 = arith.constant 0 : index
    %50 = vector.load %arg7[%c12, %c0_33] : memref<72x384xbf16, #tpu.memory_space<vmem>>, vector<4x384xbf16>
    tpu.vector_store %arg7[%c12, %c0_33], %49 {strides = array<i32>} : memref<72x384xbf16, #tpu.memory_space<vmem>>, vector<4x384xbf16>,
    %c0_34 = arith.constant 0 : index
    %c0_35 = arith.constant 0 : index
    %c24_36 = arith.constant 24 : index
    %51 = vector.load %arg2[%c0_34, %c0_35, %c24_36] : memref<1x4x456xbf16, #tpu.memory_space<vmem>>, vector<1x4x384xbf16>
    %52 = vector.shape_cast %51 : vector<1x4x384xbf16> to vector<4x384xbf16>
    %c48 = arith.constant 48 : index
    %c0_37 = arith.constant 0 : index
    %53 = vector.load %arg7[%c48, %c0_37] : memref<72x384xbf16, #tpu.memory_space<vmem>>, vector<4x384xbf16>
    tpu.vector_store %arg7[%c48, %c0_37], %52 {strides = array<i32>} : memref<72x384xbf16, #tpu.memory_space<vmem>>, vector<4x384xbf16>,
    %c0_38 = arith.constant 0 : index
    %c0_39 = arith.constant 0 : index
    %c25 = arith.constant 25 : index
    %54 = vector.load %arg1[%c0_38, %c0_39, %c25] : memref<1x4x456xbf16, #tpu.memory_space<vmem>>, vector<1x4x384xbf16>
    %55 = vector.shape_cast %54 : vector<1x4x384xbf16> to vector<4x384xbf16>
    %c16 = arith.constant 16 : index
    %c0_40 = arith.constant 0 : index
    %56 = vector.load %arg7[%c16, %c0_40] : memref<72x384xbf16, #tpu.memory_space<vmem>>, vector<4x384xbf16>
    tpu.vector_store %arg7[%c16, %c0_40], %55 {strides = array<i32>} : memref<72x384xbf16, #tpu.memory_space<vmem>>, vector<4x384xbf16>,
    %c0_41 = arith.constant 0 : index
    %c0_42 = arith.constant 0 : index
    %c25_43 = arith.constant 25 : index
    %57 = vector.load %arg2[%c0_41, %c0_42, %c25_43] : memref<1x4x456xbf16, #tpu.memory_space<vmem>>, vector<1x4x384xbf16>
    %58 = vector.shape_cast %57 : vector<1x4x384xbf16> to vector<4x384xbf16>
    %c52 = arith.constant 52 : index
    %c0_44 = arith.constant 0 : index
    %59 = vector.load %arg7[%c52, %c0_44] : memref<72x384xbf16, #tpu.memory_space<vmem>>, vector<4x384xbf16>
    tpu.vector_store %arg7[%c52, %c0_44], %58 {strides = array<i32>} : memref<72x384xbf16, #tpu.memory_space<vmem>>, vector<4x384xbf16>,
    %c0_45 = arith.constant 0 : index
    %c0_46 = arith.constant 0 : index
    %c26 = arith.constant 26 : index
    %60 = vector.load %arg1[%c0_45, %c0_46, %c26] : memref<1x4x456xbf16, #tpu.memory_space<vmem>>, vector<1x4x384xbf16>
    %61 = vector.shape_cast %60 : vector<1x4x384xbf16> to vector<4x384xbf16>
    %c20 = arith.constant 20 : index
    %c0_47 = arith.constant 0 : index
    %62 = vector.load %arg7[%c20, %c0_47] : memref<72x384xbf16, #tpu.memory_space<vmem>>, vector<4x384xbf16>
    tpu.vector_store %arg7[%c20, %c0_47], %61 {strides = array<i32>} : memref<72x384xbf16, #tpu.memory_space<vmem>>, vector<4x384xbf16>,
    %c0_48 = arith.constant 0 : index
    %c0_49 = arith.constant 0 : index
    %c26_50 = arith.constant 26 : index
    %63 = vector.load %arg2[%c0_48, %c0_49, %c26_50] : memref<1x4x456xbf16, #tpu.memory_space<vmem>>, vector<1x4x384xbf16>
    %64 = vector.shape_cast %63 : vector<1x4x384xbf16> to vector<4x384xbf16>
    %c56 = arith.constant 56 : index
    %c0_51 = arith.constant 0 : index
    %65 = vector.load %arg7[%c56, %c0_51] : memref<72x384xbf16, #tpu.memory_space<vmem>>, vector<4x384xbf16>
    tpu.vector_store %arg7[%c56, %c0_51], %64 {strides = array<i32>} : memref<72x384xbf16, #tpu.memory_space<vmem>>, vector<4x384xbf16>,
    %c0_52 = arith.constant 0 : index
    %c0_53 = arith.constant 0 : index
    %c48_54 = arith.constant 48 : index
    %66 = vector.load %arg1[%c0_52, %c0_53, %c48_54] : memref<1x4x456xbf16, #tpu.memory_space<vmem>>, vector<1x4x384xbf16>
    %67 = vector.shape_cast %66 : vector<1x4x384xbf16> to vector<4x384xbf16>
    %c24_55 = arith.constant 24 : index
    %c0_56 = arith.constant 0 : index
    %68 = vector.load %arg7[%c24_55, %c0_56] : memref<72x384xbf16, #tpu.memory_space<vmem>>, vector<4x384xbf16>
    tpu.vector_store %arg7[%c24_55, %c0_56], %67 {strides = array<i32>} : memref<72x384xbf16, #tpu.memory_space<vmem>>, vector<4x384xbf16>,
    %c0_57 = arith.constant 0 : index
    %c0_58 = arith.constant 0 : index
    %c48_59 = arith.constant 48 : index
    %69 = vector.load %arg2[%c0_57, %c0_58, %c48_59] : memref<1x4x456xbf16, #tpu.memory_space<vmem>>, vector<1x4x384xbf16>
    %70 = vector.shape_cast %69 : vector<1x4x384xbf16> to vector<4x384xbf16>
    %c60 = arith.constant 60 : index
    %c0_60 = arith.constant 0 : index
    %71 = vector.load %arg7[%c60, %c0_60] : memref<72x384xbf16, #tpu.memory_space<vmem>>, vector<4x384xbf16>
    tpu.vector_store %arg7[%c60, %c0_60], %70 {strides = array<i32>} : memref<72x384xbf16, #tpu.memory_space<vmem>>, vector<4x384xbf16>,
    %c0_61 = arith.constant 0 : index
    %c0_62 = arith.constant 0 : index
    %c49 = arith.constant 49 : index
    %72 = vector.load %arg1[%c0_61, %c0_62, %c49] : memref<1x4x456xbf16, #tpu.memory_space<vmem>>, vector<1x4x384xbf16>
    %73 = vector.shape_cast %72 : vector<1x4x384xbf16> to vector<4x384xbf16>
    %c28 = arith.constant 28 : index
    %c0_63 = arith.constant 0 : index
    %74 = vector.load %arg7[%c28, %c0_63] : memref<72x384xbf16, #tpu.memory_space<vmem>>, vector<4x384xbf16>
    tpu.vector_store %arg7[%c28, %c0_63], %73 {strides = array<i32>} : memref<72x384xbf16, #tpu.memory_space<vmem>>, vector<4x384xbf16>,
    %c0_64 = arith.constant 0 : index
    %c0_65 = arith.constant 0 : index
    %c49_66 = arith.constant 49 : index
    %75 = vector.load %arg2[%c0_64, %c0_65, %c49_66] : memref<1x4x456xbf16, #tpu.memory_space<vmem>>, vector<1x4x384xbf16>
    %76 = vector.shape_cast %75 : vector<1x4x384xbf16> to vector<4x384xbf16>
    %c64 = arith.constant 64 : index
    %c0_67 = arith.constant 0 : index
    %77 = vector.load %arg7[%c64, %c0_67] : memref<72x384xbf16, #tpu.memory_space<vmem>>, vector<4x384xbf16>
    tpu.vector_store %arg7[%c64, %c0_67], %76 {strides = array<i32>} : memref<72x384xbf16, #tpu.memory_space<vmem>>, vector<4x384xbf16>,
    %c0_68 = arith.constant 0 : index
    %c0_69 = arith.constant 0 : index
    %c50 = arith.constant 50 : index
    %78 = vector.load %arg1[%c0_68, %c0_69, %c50] : memref<1x4x456xbf16, #tpu.memory_space<vmem>>, vector<1x4x384xbf16>
    %79 = vector.shape_cast %78 : vector<1x4x384xbf16> to vector<4x384xbf16>
    %c32 = arith.constant 32 : index
    %c0_70 = arith.constant 0 : index
    %80 = vector.load %arg7[%c32, %c0_70] : memref<72x384xbf16, #tpu.memory_space<vmem>>, vector<4x384xbf16>
    tpu.vector_store %arg7[%c32, %c0_70], %79 {strides = array<i32>} : memref<72x384xbf16, #tpu.memory_space<vmem>>, vector<4x384xbf16>,
    %c0_71 = arith.constant 0 : index
    %c0_72 = arith.constant 0 : index
    %c50_73 = arith.constant 50 : index
    %81 = vector.load %arg2[%c0_71, %c0_72, %c50_73] : memref<1x4x456xbf16, #tpu.memory_space<vmem>>, vector<1x4x384xbf16>
    %82 = vector.shape_cast %81 : vector<1x4x384xbf16> to vector<4x384xbf16>
    %c68 = arith.constant 68 : index
    %c0_74 = arith.constant 0 : index
    %83 = vector.load %arg7[%c68, %c0_74] : memref<72x384xbf16, #tpu.memory_space<vmem>>, vector<4x384xbf16>
    tpu.vector_store %arg7[%c68, %c0_74], %82 {strides = array<i32>} : memref<72x384xbf16, #tpu.memory_space<vmem>>, vector<4x384xbf16>,
    %c0_75 = arith.constant 0 : index
    %c0_76 = arith.constant 0 : index
    %84 = vector.load %arg7[%c0_75, %c0_76] : memref<72x384xbf16, #tpu.memory_space<vmem>>, vector<72x384xbf16>
    %cst = arith.constant dense<0.000000e+00> : vector<4x384xf32>
    %85 = tpu.matmul %28, %84, %cst {dimension_numbers = #tpu.dot_dimension_numbers<[1], [0], [0], [1], [0, 0, 1, 1], [], []>} : vector<4x72xbf16>, vector<72x384xbf16>, vector<4x384xf32> -> vector<4x384xf32>
    %86 = vector.broadcast %22 : vector<4x1xf32> to vector<4x384xf32>
    %87 = arith.addf %85, %86 : vector<4x384xf32>
    %88 = vector.broadcast %20 : vector<1x384xf32> to vector<4x384xf32>
    %89 = arith.mulf %87, %88 : vector<4x384xf32>
    %cst_77 = arith.constant dense<0.000000e+00> : vector<4xf32>
    %90 = vector.multi_reduction <add>, %89, %cst_77 [1] : vector<4x384xf32> to vector<4xf32>
    %91 = vector.shape_cast %90 : vector<4xf32> to vector<4x1xf32>
    %cst_78 = arith.constant 2.560000e+02 : f32
    %92 = vector.broadcast %cst_78 : f32 to vector<4x1xf32>
    %93 = arith.divf %91, %92 : vector<4x1xf32>
    %94 = vector.broadcast %93 : vector<4x1xf32> to vector<4x384xf32>
    %95 = arith.subf %87, %94 : vector<4x384xf32>
    %96 = vector.broadcast %20 : vector<1x384xf32> to vector<4x384xf32>
    %97 = arith.mulf %95, %96 : vector<4x384xf32>
    %98 = arith.mulf %97, %97 : vector<4x384xf32>
    %cst_79 = arith.constant dense<0.000000e+00> : vector<4xf32>
    %99 = vector.multi_reduction <add>, %98, %cst_79 [1] : vector<4x384xf32> to vector<4xf32>
    %100 = vector.shape_cast %99 : vector<4xf32> to vector<4x1xf32>
    %cst_80 = arith.constant 2.560000e+02 : f32
    %101 = vector.broadcast %cst_80 : f32 to vector<4x1xf32>
    %102 = arith.divf %100, %101 : vector<4x1xf32>
    %103 = vector.broadcast %93 : vector<4x1xf32> to vector<4x384xf32>
    %104 = arith.subf %87, %103 : vector<4x384xf32>
    %cst_81 = arith.constant 9.99999974E-6 : f32
    %105 = vector.broadcast %cst_81 : f32 to vector<4x1xf32>
    %106 = arith.addf %102, %105 : vector<4x1xf32>
    %107 = math.rsqrt %106 : vector<4x1xf32>
    %108 = vector.broadcast %107 : vector<4x1xf32> to vector<4x384xf32>
    %109 = arith.mulf %104, %108 : vector<4x384xf32>
    %110 = vector.broadcast %23 : vector<4x1xf32> to vector<4x384xf32>
    %111 = arith.mulf %109, %110 : vector<4x384xf32>
    %112 = vector.broadcast %24 : vector<4x1xf32> to vector<4x384xf32>
    %113 = arith.addf %111, %112 : vector<4x384xf32>
    %cst_82 = arith.constant 0.000000e+00 : f32
    %114 = vector.broadcast %cst_82 : f32 to vector<4x384xf32>
    %115 = arith.cmpf oge, %113, %114 : vector<4x384xf32>
    %cst_83 = arith.constant 0.00999999977 : f32
    %116 = vector.broadcast %cst_83 : f32 to vector<4x384xf32>
    %117 = arith.mulf %116, %113 : vector<4x384xf32>
    %118 = arith.select %115, %113, %117 : vector<4x384xi1>, vector<4x384xf32>
    %cst_84 = arith.constant 0.000000e+00 : bf16
    %119 = vector.broadcast %cst_84 : bf16 to vector<4x456xbf16>
    %c0_85 = arith.constant 0 : index
    %c0_86 = arith.constant 0 : index
    %120 = vector.load %arg9[%c0_85, %c0_86] : memref<4x456xbf16, #tpu.memory_space<vmem>>, vector<4x456xbf16>
    tpu.vector_store %arg9[%c0_85, %c0_86], %119 {strides = array<i32>} : memref<4x456xbf16, #tpu.memory_space<vmem>>, vector<4x456xbf16>,
    %121 = vector.broadcast %20 : vector<1x384xf32> to vector<4x384xf32>
    %122 = arith.mulf %118, %121 : vector<4x384xf32>
    %123 = arith.truncf %122 : vector<4x384xf32> to vector<4x384xbf16>
    %c0_87 = arith.constant 0 : index
    %c25_88 = arith.constant 25 : index
    %124 = vector.load %arg9[%c0_87, %c25_88] : memref<4x456xbf16, #tpu.memory_space<vmem>>, vector<4x384xbf16>
    tpu.vector_store %arg9[%c0_87, %c25_88], %123 {strides = array<i32>} : memref<4x456xbf16, #tpu.memory_space<vmem>>, vector<4x384xbf16>,
    %c0_89 = arith.constant 0 : index
    %c0_90 = arith.constant 0 : index
    %125 = vector.load %arg9[%c0_89, %c0_90] : memref<4x456xbf16, #tpu.memory_space<vmem>>, vector<4x384xbf16>
    %c0_91 = arith.constant 0 : index
    %c0_92 = arith.constant 0 : index
    %126 = vector.load %arg8[%c0_91, %c0_92] : memref<36x384xbf16, #tpu.memory_space<vmem>>, vector<4x384xbf16>
    tpu.vector_store %arg8[%c0_91, %c0_92], %125 {strides = array<i32>} : memref<36x384xbf16, #tpu.memory_space<vmem>>, vector<4x384xbf16>,
    %c0_93 = arith.constant 0 : index
    %c1_94 = arith.constant 1 : index
    %127 = vector.load %arg9[%c0_93, %c1_94] : memref<4x456xbf16, #tpu.memory_space<vmem>>, vector<4x384xbf16>
    %c4_95 = arith.constant 4 : index
    %c0_96 = arith.constant 0 : index
    %128 = vector.load %arg8[%c4_95, %c0_96] : memref<36x384xbf16, #tpu.memory_space<vmem>>, vector<4x384xbf16>
    tpu.vector_store %arg8[%c4_95, %c0_96], %127 {strides = array<i32>} : memref<36x384xbf16, #tpu.memory_space<vmem>>, vector<4x384xbf16>,
    %c0_97 = arith.constant 0 : index
    %c2_98 = arith.constant 2 : index
    %129 = vector.load %arg9[%c0_97, %c2_98] : memref<4x456xbf16, #tpu.memory_space<vmem>>, vector<4x384xbf16>
    %c8_99 = arith.constant 8 : index
    %c0_100 = arith.constant 0 : index
    %130 = vector.load %arg8[%c8_99, %c0_100] : memref<36x384xbf16, #tpu.memory_space<vmem>>, vector<4x384xbf16>
    tpu.vector_store %arg8[%c8_99, %c0_100], %129 {strides = array<i32>} : memref<36x384xbf16, #tpu.memory_space<vmem>>, vector<4x384xbf16>,
    %c0_101 = arith.constant 0 : index
    %c24_102 = arith.constant 24 : index
    %131 = vector.load %arg9[%c0_101, %c24_102] : memref<4x456xbf16, #tpu.memory_space<vmem>>, vector<4x384xbf16>
    %c12_103 = arith.constant 12 : index
    %c0_104 = arith.constant 0 : index
    %132 = vector.load %arg8[%c12_103, %c0_104] : memref<36x384xbf16, #tpu.memory_space<vmem>>, vector<4x384xbf16>
    tpu.vector_store %arg8[%c12_103, %c0_104], %131 {strides = array<i32>} : memref<36x384xbf16, #tpu.memory_space<vmem>>, vector<4x384xbf16>,
    %c0_105 = arith.constant 0 : index
    %c25_106 = arith.constant 25 : index
    %133 = vector.load %arg9[%c0_105, %c25_106] : memref<4x456xbf16, #tpu.memory_space<vmem>>, vector<4x384xbf16>
    %c16_107 = arith.constant 16 : index
    %c0_108 = arith.constant 0 : index
    %134 = vector.load %arg8[%c16_107, %c0_108] : memref<36x384xbf16, #tpu.memory_space<vmem>>, vector<4x384xbf16>
    tpu.vector_store %arg8[%c16_107, %c0_108], %133 {strides = array<i32>} : memref<36x384xbf16, #tpu.memory_space<vmem>>, vector<4x384xbf16>,
    %c0_109 = arith.constant 0 : index
    %c26_110 = arith.constant 26 : index
    %135 = vector.load %arg9[%c0_109, %c26_110] : memref<4x456xbf16, #tpu.memory_space<vmem>>, vector<4x384xbf16>
    %c20_111 = arith.constant 20 : index
    %c0_112 = arith.constant 0 : index
    %136 = vector.load %arg8[%c20_111, %c0_112] : memref<36x384xbf16, #tpu.memory_space<vmem>>, vector<4x384xbf16>
    tpu.vector_store %arg8[%c20_111, %c0_112], %135 {strides = array<i32>} : memref<36x384xbf16, #tpu.memory_space<vmem>>, vector<4x384xbf16>,
    %c0_113 = arith.constant 0 : index
    %c48_114 = arith.constant 48 : index
    %137 = vector.load %arg9[%c0_113, %c48_114] : memref<4x456xbf16, #tpu.memory_space<vmem>>, vector<4x384xbf16>
    %c24_115 = arith.constant 24 : index
    %c0_116 = arith.constant 0 : index
    %138 = vector.load %arg8[%c24_115, %c0_116] : memref<36x384xbf16, #tpu.memory_space<vmem>>, vector<4x384xbf16>
    tpu.vector_store %arg8[%c24_115, %c0_116], %137 {strides = array<i32>} : memref<36x384xbf16, #tpu.memory_space<vmem>>, vector<4x384xbf16>,
    %c0_117 = arith.constant 0 : index
    %c49_118 = arith.constant 49 : index
    %139 = vector.load %arg9[%c0_117, %c49_118] : memref<4x456xbf16, #tpu.memory_space<vmem>>, vector<4x384xbf16>
    %c28_119 = arith.constant 28 : index
    %c0_120 = arith.constant 0 : index
    %140 = vector.load %arg8[%c28_119, %c0_120] : memref<36x384xbf16, #tpu.memory_space<vmem>>, vector<4x384xbf16>
    tpu.vector_store %arg8[%c28_119, %c0_120], %139 {strides = array<i32>} : memref<36x384xbf16, #tpu.memory_space<vmem>>, vector<4x384xbf16>,
    %c0_121 = arith.constant 0 : index
    %c50_122 = arith.constant 50 : index
    %141 = vector.load %arg9[%c0_121, %c50_122] : memref<4x456xbf16, #tpu.memory_space<vmem>>, vector<4x384xbf16>
    %c32_123 = arith.constant 32 : index
    %c0_124 = arith.constant 0 : index
    %142 = vector.load %arg8[%c32_123, %c0_124] : memref<36x384xbf16, #tpu.memory_space<vmem>>, vector<4x384xbf16>
    tpu.vector_store %arg8[%c32_123, %c0_124], %141 {strides = array<i32>} : memref<36x384xbf16, #tpu.memory_space<vmem>>, vector<4x384xbf16>,
    %c0_125 = arith.constant 0 : index
    %c0_126 = arith.constant 0 : index
    %143 = vector.load %arg8[%c0_125, %c0_126] : memref<36x384xbf16, #tpu.memory_space<vmem>>, vector<36x384xbf16>
    %cst_127 = arith.constant dense<0.000000e+00> : vector<4x384xf32>
    %144 = tpu.matmul %29, %143, %cst_127 {dimension_numbers = #tpu.dot_dimension_numbers<[1], [0], [0], [1], [0, 0, 1, 1], [], []>} : vector<4x36xbf16>, vector<36x384xbf16>, vector<4x384xf32> -> vector<4x384xf32>
    %145 = vector.broadcast %25 : vector<4x1xf32> to vector<4x384xf32>
    %146 = arith.addf %144, %145 : vector<4x384xf32>
    %147 = vector.broadcast %20 : vector<1x384xf32> to vector<4x384xf32>
    %148 = arith.mulf %146, %147 : vector<4x384xf32>
    %cst_128 = arith.constant dense<0.000000e+00> : vector<4xf32>
    %149 = vector.multi_reduction <add>, %148, %cst_128 [1] : vector<4x384xf32> to vector<4xf32>
    %150 = vector.shape_cast %149 : vector<4xf32> to vector<4x1xf32>
    %cst_129 = arith.constant 2.560000e+02 : f32
    %151 = vector.broadcast %cst_129 : f32 to vector<4x1xf32>
    %152 = arith.divf %150, %151 : vector<4x1xf32>
    %153 = vector.broadcast %152 : vector<4x1xf32> to vector<4x384xf32>
    %154 = arith.subf %146, %153 : vector<4x384xf32>
    %155 = vector.broadcast %20 : vector<1x384xf32> to vector<4x384xf32>
    %156 = arith.mulf %154, %155 : vector<4x384xf32>
    %157 = arith.mulf %156, %156 : vector<4x384xf32>
    %cst_130 = arith.constant dense<0.000000e+00> : vector<4xf32>
    %158 = vector.multi_reduction <add>, %157, %cst_130 [1] : vector<4x384xf32> to vector<4xf32>
    %159 = vector.shape_cast %158 : vector<4xf32> to vector<4x1xf32>
    %cst_131 = arith.constant 2.560000e+02 : f32
    %160 = vector.broadcast %cst_131 : f32 to vector<4x1xf32>
    %161 = arith.divf %159, %160 : vector<4x1xf32>
    %162 = vector.broadcast %152 : vector<4x1xf32> to vector<4x384xf32>
    %163 = arith.subf %146, %162 : vector<4x384xf32>
    %cst_132 = arith.constant 9.99999974E-6 : f32
    %164 = vector.broadcast %cst_132 : f32 to vector<4x1xf32>
    %165 = arith.addf %161, %164 : vector<4x1xf32>
    %166 = math.rsqrt %165 : vector<4x1xf32>
    %167 = vector.broadcast %166 : vector<4x1xf32> to vector<4x384xf32>
    %168 = arith.mulf %163, %167 : vector<4x384xf32>
    %169 = vector.broadcast %26 : vector<4x1xf32> to vector<4x384xf32>
    %170 = arith.mulf %168, %169 : vector<4x384xf32>
    %171 = vector.broadcast %27 : vector<4x1xf32> to vector<4x384xf32>
    %172 = arith.addf %170, %171 : vector<4x384xf32>
    %cst_133 = arith.constant 0.000000e+00 : f32
    %173 = vector.broadcast %cst_133 : f32 to vector<4x384xf32>
    %174 = arith.cmpf oge, %172, %173 : vector<4x384xf32>
    %cst_134 = arith.constant 0.00999999977 : f32
    %175 = vector.broadcast %cst_134 : f32 to vector<4x384xf32>
    %176 = arith.mulf %175, %172 : vector<4x384xf32>
    %177 = arith.select %174, %172, %176 : vector<4x384xi1>, vector<4x384xf32>
    %c0_135 = arith.constant 0 : index
    %c0_136 = arith.constant 0 : index
    %c0_137 = arith.constant 0 : index
    %178 = vector.load %arg6[%c0_135, %c0_136, %c0_137] : memref<1x4x384xf32, #tpu.memory_space<vmem>>, vector<1x4x384xf32>
    %179 = vector.shape_cast %178 : vector<1x4x384xf32> to vector<4x384xf32>
    %180 = vector.shape_cast %177 : vector<4x384xf32> to vector<1x4x384xf32>
    tpu.vector_store %arg6[%c0_135, %c0_136, %c0_137], %180 {strides = array<i32>} : memref<1x4x384xf32, #tpu.memory_space<vmem>>, vector<1x4x384xf32>,
    return
  }
  func.func @transform_0(%arg0: i32) -> (i32, i32, i32) {
    %c0_i32 = arith.constant 0 : i32
    %c0_i32_0 = arith.constant 0 : i32
    %c0_i32_1 = arith.constant 0 : i32
    return %arg0, %c0_i32, %c0_i32_0 : i32, i32, i32
  }
  func.func @transform_1(%arg0: i32) -> (i32, i32, i32) {
    %c0_i32 = arith.constant 0 : i32
    %c0_i32_0 = arith.constant 0 : i32
    %c0_i32_1 = arith.constant 0 : i32
    return %arg0, %c0_i32, %c0_i32_0 : i32, i32, i32
  }
  func.func @transform_2(%arg0: i32) -> (i32, i32) {
    %c0_i32 = arith.constant 0 : i32
    %c0_i32_0 = arith.constant 0 : i32
    %c0_i32_1 = arith.constant 0 : i32
    return %c0_i32, %c0_i32_0 : i32, i32
  }
  func.func @transform_3(%arg0: i32) -> (i32, i32) {
    %c0_i32 = arith.constant 0 : i32
    %c0_i32_0 = arith.constant 0 : i32
    %c0_i32_1 = arith.constant 0 : i32
    return %c0_i32, %c0_i32_0 : i32, i32
  }
  func.func @transform_4(%arg0: i32) -> (i32, i32) {
    %c0_i32 = arith.constant 0 : i32
    %c0_i32_0 = arith.constant 0 : i32
    %c0_i32_1 = arith.constant 0 : i32
    return %c0_i32, %c0_i32_0 : i32, i32
  }
  func.func @transform_5(%arg0: i32) -> (i32, i32, i32) {
    %c0_i32 = arith.constant 0 : i32
    %c0_i32_0 = arith.constant 0 : i32
    %c0_i32_1 = arith.constant 0 : i32
    return %arg0, %c0_i32, %c0_i32_0 : i32, i32, i32
  }
}

</mosaic_0001>

<llo_original>
// kernel: up_block_forward.1
$region0: #{up_block_forward.1}
  #allocation0 [shape = 'u32[]', space=smem, size = 0x4, offset = 0x4, fixed_abs, tag = 'smem constant byte address 0x4 - core index']
  #allocation1 [shape = 'u32[144,128]{1,0:T(1,128)}', space=vmem, size = 0x12000, scoped, tag = 'internal scratch']
  #allocation2 [shape = 'bf16[72,384]{1,0:T(8,128)(2,1)}', space=vmem, size = 0xd800, scoped, tag = 'scratch operand']
  #allocation3 [shape = 'bf16[36,384]{1,0:T(8,128)(2,1)}', space=vmem, size = 0x7800, scoped, tag = 'scratch operand']
  #allocation4 [shape = 'bf16[4,456]{1,0:T(4,128)(2,1)}', space=vmem, size = 0x1000, scoped, tag = 'scratch operand']
  %s0 = inlined_call_operand.hbm [shape: bf16[2,4,456], index: 0, kind: input, shape index: {}]
  %s1 = inlined_call_operand.hbm [shape: bf16[2,4,456], index: 1, kind: input, shape index: {}]
  %s2 = inlined_call_operand.hbm [shape: bf16[4,72], index: 2, kind: input, shape index: {}]
  %s3 = inlined_call_operand.hbm [shape: bf16[4,36], index: 3, kind: input, shape index: {}]
  %s4 = inlined_call_operand.hbm [shape: f32[4,8], index: 4, kind: input, shape index: {}]
  %s5 = inlined_call_operand.hbm [shape: f32[2,4,384], index: 5, kind: output, shape index: {}]
  %s6 = sld [smem:[#allocation0]]
  $region73: #{up_block_forward.1} parent=0
    _
  %s8 = ssub.s32 1, %s6
  %s9 = scalar_select 0, %s8, %s6
  $region1: #{up_block_forward.1} parent=0
    #allocation5 [shape = 'u8[8192]{0}', space=vmem, size = 0x2000, scoped, tag = 'input window, operand 0']
    #allocation6 [shape = 's32[2]{0}', space=sflag, size = 0x8, scoped, tag = 'scoped memory for up_block_forward.1']
    #allocation7 [shape = 's32[2]{0}', space=sflag, size = 0x8, scoped, tag = 'scoped memory for up_block_forward.1']
    #allocation8 [shape = 'u8[8192]{0}', space=vmem, size = 0x2000, scoped, tag = 'input window, operand 1']
    #allocation9 [shape = 's32[2]{0}', space=sflag, size = 0x8, scoped, tag = 'scoped memory for up_block_forward.1']
    #allocation10 [shape = 'u8[1024]{0}', space=vmem, size = 0x400, scoped, tag = 'input window, operand 2, single buffered']
    #allocation11 [shape = 'u8[1024]{0}', space=vmem, size = 0x400, scoped, tag = 'input window, operand 3, single buffered']
    #allocation12 [shape = 's32[1]{0}', space=sflag, size = 0x4, scoped, tag = 'scoped memory for up_block_forward.1']
    #allocation13 [shape = 'u8[2048]{0}', space=vmem, size = 0x800, scoped, tag = 'input window, operand 4, single buffered']
    #allocation14 [shape = 'u8[12288]{0}', space=vmem, size = 0x3000, scoped, tag = 'output window, operand 0']
    %10 = vsyncpa [#allocation6], 0
    %s11 = scalar_lea.sflag [#allocation6], 1
    %12 = vsyncpa %s11, 0
    %13 = vsyncpa [#allocation9], 0
    %s14 = scalar_lea.sflag [#allocation9], 1
    %15 = vsyncpa %s14, 0
    %16 = vsyncpa [#allocation12], 0
    %17 = vsyncpa [#allocation7], 0
    %s18 = scalar_lea.sflag [#allocation7], 1
    %19 = vsyncpa %s18, 0
    loop: start=0, step=1, limit=4
    $region2: #{up_block_forward.1} parent=1 // loop_pre_header
      _
    $region3: #{up_block_forward.1} parent=1 // loop_header
      %s21 = sphi 0, %s25
      %p22 = scmp.ge.s32.totalorder %s21, 4
      %s31 = sphi 0, %s33
      %s34 = sphi 0, %s31
      %s35 = sphi 0, %s34
      %s51 = sphi 0, %s35
      %s57 = sphi 0, %s59
      %s60 = sphi 0, %s57
      %s61 = sphi 0, %s60
      %s77 = sphi 0, %s61
      %s81 = sphi 0, %s81
      %s83 = sphi 0, %s81
      %s84 = sphi 0, %s83
      %s98 = sphi 0, %s84
      %s102 = sphi 0, %s102
      %s104 = sphi 0, %s102
      %s105 = sphi 0, %s104
      %s119 = sphi 0, %s105
      %s123 = sphi 0, %s123
      %s125 = sphi 0, %s123
      %s126 = sphi 0, %s125
      %s140 = sphi 0, %s126
      %s146 = sphi 0, %s148
      %s149 = sphi 0, %s146
      %s150 = sphi 0, %s149
      %s166 = sphi 0, %s150
    $region4: #{up_block_forward.1} parent=1 // loop_header_branch
      %24 = sbr.rel (%p22) target = $region8
    $region5: #{up_block_forward.1} parent=1 // loop_body
      %s26 = ssub.s32 %s21, 1
      %s27 = ssub.s32 %s21, 2
      %s28 = sadd.s32 %s21, 1
      %s29 = ssub.s32 %s21, %s28
      %p30 = scmp.eq.s32.totalorder %s29, 0
      %s32 = sadd.s32 %s31, 1
      %s33 = scalar_select %p30, %s31, %s32
      %p36 = pneg %p30
      %p37 = scmp.eq.s32.totalorder %s21, 1
      %p38 = por %p36, %p37
      %p39 = scmp.ne.s32.totalorder %s31, %s34
      %p40 = scmp.eq.s32.totalorder %s21, 0
      %p41 = por %p39, %p40
      %p42 = scmp.ne.s32.totalorder %s31, %s34
      %p43 = scmp.eq.s32.totalorder %s26, 1
      %p44 = por %p42, %p43
      %p45 = scmp.ne.s32.totalorder %s34, %s35
      %p46 = scmp.eq.s32.totalorder %s26, 0
      %p47 = por %p45, %p46
      %p48 = scmp.ne.s32.totalorder %s34, %s35
      %p49 = scmp.eq.s32.totalorder %s27, 1
      %p50 = por %p48, %p49
      %p52 = scmp.ne.s32.totalorder %s35, %s51
      %p53 = scmp.eq.s32.totalorder %s27, 0
      %p54 = por %p52, %p53
      %s55 = ssub.s32 %s21, %s28
      %p56 = scmp.eq.s32.totalorder %s55, 0
      %s58 = sadd.s32 %s57, 1
      %s59 = scalar_select %p56, %s57, %s58
      %p62 = pneg %p56
      %p63 = scmp.eq.s32.totalorder %s21, 1
      %p64 = por %p62, %p63
      %p65 = scmp.ne.s32.totalorder %s57, %s60
      %p66 = scmp.eq.s32.totalorder %s21, 0
      %p67 = por %p65, %p66
      %p68 = scmp.ne.s32.totalorder %s57, %s60
      %p69 = scmp.eq.s32.totalorder %s26, 1
      %p70 = por %p68, %p69
      %p71 = scmp.ne.s32.totalorder %s60, %s61
      %p72 = scmp.eq.s32.totalorder %s26, 0
      %p73 = por %p71, %p72
      %p74 = scmp.ne.s32.totalorder %s60, %s61
      %p75 = scmp.eq.s32.totalorder %s27, 1
      %p76 = por %p74, %p75
      %p78 = scmp.ne.s32.totalorder %s61, %s77
      %p79 = scmp.eq.s32.totalorder %s27, 0
      %p80 = por %p78, %p79
      %s82 = sadd.s32 %s81, 1
      %p85 = scmp.eq.s32.totalorder %s21, 1
      %p86 = scmp.ne.s32.totalorder %s81, %s83
      %p87 = scmp.eq.s32.totalorder %s21, 0
      %p88 = por %p86, %p87
      %p89 = scmp.ne.s32.totalorder %s81, %s83
      %p90 = scmp.eq.s32.totalorder %s26, 1
      %p91 = por %p89, %p90
      %p92 = scmp.ne.s32.totalorder %s83, %s84
      %p93 = scmp.eq.s32.totalorder %s26, 0
      %p94 = por %p92, %p93
      %p95 = scmp.ne.s32.totalorder %s83, %s84
      %p96 = scmp.eq.s32.totalorder %s27, 1
      %p97 = por %p95, %p96
      %p99 = scmp.ne.s32.totalorder %s84, %s98
      %p100 = scmp.eq.s32.totalorder %s27, 0
      %p101 = por %p99, %p100
      %s103 = sadd.s32 %s102, 1
      %p106 = scmp.eq.s32.totalorder %s21, 1
      %p107 = scmp.ne.s32.totalorder %s102, %s104
      %p108 = scmp.eq.s32.totalorder %s21, 0
      %p109 = por %p107, %p108
      %p110 = scmp.ne.s32.totalorder %s102, %s104
      %p111 = scmp.eq.s32.totalorder %s26, 1
      %p112 = por %p110, %p111
      %p113 = scmp.ne.s32.totalorder %s104, %s105
      %p114 = scmp.eq.s32.totalorder %s26, 0
      %p115 = por %p113, %p114
      %p116 = scmp.ne.s32.totalorder %s104, %s105
      %p117 = scmp.eq.s32.totalorder %s27, 1
      %p118 = por %p116, %p117
      %p120 = scmp.ne.s32.totalorder %s105, %s119
      %p121 = scmp.eq.s32.totalorder %s27, 0
      %p122 = por %p120, %p121
      %s124 = sadd.s32 %s123, 1
      %p127 = scmp.eq.s32.totalorder %s21, 1
      %p128 = scmp.ne.s32.totalorder %s123, %s125
      %p129 = scmp.eq.s32.totalorder %s21, 0
      %p130 = por %p128, %p129
      %p131 = scmp.ne.s32.totalorder %s123, %s125
      %p132 = scmp.eq.s32.totalorder %s26, 1
      %p133 = por %p131, %p132
      %p134 = scmp.ne.s32.totalorder %s125, %s126
      %p135 = scmp.eq.s32.totalorder %s26, 0
      %p136 = por %p134, %p135
      %p137 = scmp.ne.s32.totalorder %s125, %s126
      %p138 = scmp.eq.s32.totalorder %s27, 1
      %p139 = por %p137, %p138
      %p141 = scmp.ne.s32.totalorder %s126, %s140
      %p142 = scmp.eq.s32.totalorder %s27, 0
      %p143 = por %p141, %p142
      %s144 = ssub.s32 %s21, %s28
      %p145 = scmp.eq.s32.totalorder %s144, 0
      %s147 = sadd.s32 %s146, 1
      %s148 = scalar_select %p145, %s146, %s147
      %p151 = pneg %p145
      %p152 = scmp.eq.s32.totalorder %s21, 1
      %p153 = por %p151, %p152
      %p154 = scmp.ne.s32.totalorder %s146, %s149
      %p155 = scmp.eq.s32.totalorder %s21, 0
      %p156 = por %p154, %p155
      %p157 = scmp.ne.s32.totalorder %s146, %s149
      %p158 = scmp.eq.s32.totalorder %s26, 1
      %p159 = por %p157, %p158
      %p160 = scmp.ne.s32.totalorder %s149, %s150
      %p161 = scmp.eq.s32.totalorder %s26, 0
      %p162 = por %p160, %p161
      %p163 = scmp.ne.s32.totalorder %s149, %s150
      %p164 = scmp.eq.s32.totalorder %s27, 1
      %p165 = por %p163, %p164
      %p167 = scmp.ne.s32.totalorder %s150, %s166
      %p168 = scmp.eq.s32.totalorder %s27, 0
      %p169 = por %p167, %p168
      %p170 = scmp.le.s32.totalorder 1, %s21
      %p171 = scmp.lt.s32.totalorder %s21, 3
      %p172 = pnand %p170, %p171
      %p173 = pneg %p172
      // Predicated region
      $region9: #{up_block_forward.1} parent=5 // pred_check
        _
      $region10: #{up_block_forward.1} parent=5 // pred_check_branch
        %175 = sbr.rel (%p172) target = $region12
      $region11: #{up_block_forward.1} parent=5 // pred_region
        %s176 = ssub.s32 %s21, 1
        // Predicated region
        $region13: #{up_block_forward.1} parent=11 // pred_check
          %p177 = pneg %p94
        $region14: #{up_block_forward.1} parent=11 // pred_check_branch
          %179 = sbr.rel (%p177) target = $region16
        $region15: #{up_block_forward.1} parent=11 // pred_region
          %s181 = ssub.s32 32, 32
          %182 = vsyncadd [#allocation9], %s181
          %s184 = sshll.u32 [#allocation10], 4
          %s185 = int_to_ptr.vmem [resolvable:$true] %s184
          %187 = dma.hbm_to_vmem [thread:$0]  %s2, 32, %s185, [#allocation9]
        $region16: #{up_block_forward.1} parent=11 // pred_fallthru
          _
        // Predicated region
        $region17: #{up_block_forward.1} parent=11 // pred_check
          %p188 = pneg %p115
        $region18: #{up_block_forward.1} parent=11 // pred_check_branch
          %190 = sbr.rel (%p188) target = $region20
        $region19: #{up_block_forward.1} parent=11 // pred_region
          %s192 = ssub.s32 32, 32
          %193 = vsyncadd [#allocation12], %s192
          %s195 = sshll.u32 [#allocation11], 4
          %s196 = int_to_ptr.vmem [resolvable:$true] %s195
          %198 = dma.hbm_to_vmem [thread:$0]  %s3, 32, %s196, [#allocation12]
        $region20: #{up_block_forward.1} parent=11 // pred_fallthru
          _
        // Predicated region
        $region21: #{up_block_forward.1} parent=11 // pred_check
          %p199 = pneg %p136
        $region22: #{up_block_forward.1} parent=11 // pred_check_branch
          %201 = sbr.rel (%p199) target = $region24
        $region23: #{up_block_forward.1} parent=11 // pred_region
          %s203 = ssub.s32 64, 64
          %204 = vsyncadd [#allocation12], %s203
          %s206 = sshll.u32 [#allocation13], 4
          %s207 = int_to_ptr.vmem [resolvable:$true] %s206
          %209 = dma.hbm_to_vmem [thread:$0]  %s4, 64, %s207, [#allocation12]
        $region24: #{up_block_forward.1} parent=11 // pred_fallthru
          _
      $region12: #{up_block_forward.1} parent=5 // pred_fallthru
        _
      %p210 = scmp.lt.s32.totalorder %s21, 2
      // Predicated region
      $region25: #{up_block_forward.1} parent=5 // pred_check
        %p211 = pneg %p210
      $region26: #{up_block_forward.1} parent=5 // pred_check_branch
        %213 = sbr.rel (%p211) target = $region28
      $region27: #{up_block_forward.1} parent=5 // pred_region
        // Predicated region
        $region29: #{up_block_forward.1} parent=27 // pred_check
          %p214 = pneg %p41
        $region30: #{up_block_forward.1} parent=27 // pred_check_branch
          %216 = sbr.rel (%p214) target = $region32
        $region31: #{up_block_forward.1} parent=27 // pred_region
          %s217 = sand.u32 %s31, 1
          %s218 = scalar_lea.sflag [#allocation6], %s217
          %s219 = sand.u32 %s31, 1
          %s220 = smul.addr %s219, 8
          %s221 = scalar_lea.vmem [#allocation5], %s220
          %s223 = ssub.s32 128, 128
          %224 = vsyncadd %s218, %s223
          %s225 = smul.addr %s21, 4
          %s226 = smul.addr %s225, 32
          %s227 = scalar_lea.hbm %s0, %s226
          %s229 = sshll.u32 %s221, 4
          %s230 = int_to_ptr.vmem [resolvable:$true] %s229
          %232 = dma.hbm_to_vmem [thread:$0]  %s227, 128, %s230, %s218
        $region32: #{up_block_forward.1} parent=27 // pred_fallthru
          _
        // Predicated region
        $region33: #{up_block_forward.1} parent=27 // pred_check
          %p233 = pneg %p67
        $region34: #{up_block_forward.1} parent=27 // pred_check_branch
          %235 = sbr.rel (%p233) target = $region36
        $region35: #{up_block_forward.1} parent=27 // pred_region
          %s236 = sand.u32 %s21, 1
          %s237 = scalar_lea.sflag [#allocation9], %s236
          %s238 = sand.u32 %s57, 1
          %s239 = smul.addr %s238, 8
          %s240 = scalar_lea.vmem [#allocation8], %s239
          %s242 = ssub.s32 128, 128
          %243 = vsyncadd %s237, %s242
          %s244 = smul.addr %s21, 4
          %s245 = smul.addr %s244, 32
          %s246 = scalar_lea.hbm %s1, %s245
          %s248 = sshll.u32 %s240, 4
          %s249 = int_to_ptr.vmem [resolvable:$true] %s248
          %251 = dma.hbm_to_vmem [thread:$0]  %s246, 128, %s249, %s237
        $region36: #{up_block_forward.1} parent=27 // pred_fallthru
          _
      $region28: #{up_block_forward.1} parent=5 // pred_fallthru
        _
      %p252 = scmp.le.s32.totalorder 1, %s21
      %p253 = scmp.lt.s32.totalorder %s21, 3
      %p254 = pnand %p252, %p253
      %p255 = pneg %p254
      // Predicated region
      $region37: #{up_block_forward.1} parent=5 // pred_check
        _
      $region38: #{up_block_forward.1} parent=5 // pred_check_branch
        %257 = sbr.rel (%p254) target = $region40
      $region39: #{up_block_forward.1} parent=5 // pred_region
        %s258 = ssub.s32 %s21, 1
        %s259 = sand.u32 %s34, 1
        %s260 = scalar_lea.sflag [#allocation6], %s259
        %s261 = sand.u32 %s34, 1
        %s262 = smul.addr %s261, 8
        %s263 = scalar_lea.vmem [#allocation5], %s262
        // Predicated region
        $region41: #{up_block_forward.1} parent=39 // pred_check
          %p264 = pneg %p47
        $region42: #{up_block_forward.1} parent=39 // pred_check_branch
          %266 = sbr.rel (%p264) target = $region44
        $region43: #{up_block_forward.1} parent=39 // pred_region
          %267 = dma.done %s260, 128
        $region44: #{up_block_forward.1} parent=39 // pred_fallthru
          _
        %s268 = sand.u32 %s26, 1
        %s269 = scalar_lea.sflag [#allocation9], %s268
        %s270 = sand.u32 %s60, 1
        %s271 = smul.addr %s270, 8
        %s272 = scalar_lea.vmem [#allocation8], %s271
        // Predicated region
        $region45: #{up_block_forward.1} parent=39 // pred_check
          %p273 = pneg %p73
        $region46: #{up_block_forward.1} parent=39 // pred_check_branch
          %275 = sbr.rel (%p273) target = $region48
        $region47: #{up_block_forward.1} parent=39 // pred_region
          %276 = dma.done %s269, 128
        $region48: #{up_block_forward.1} parent=39 // pred_fallthru
          _
        // Predicated region
        $region49: #{up_block_forward.1} parent=39 // pred_check
          %p277 = pneg %p94
        $region50: #{up_block_forward.1} parent=39 // pred_check_branch
          %279 = sbr.rel (%p277) target = $region52
        $region51: #{up_block_forward.1} parent=39 // pred_region
          %280 = dma.done [#allocation9], 32
        $region52: #{up_block_forward.1} parent=39 // pred_fallthru
          _
        // Predicated region
        $region53: #{up_block_forward.1} parent=39 // pred_check
          %p281 = pneg %p115
        $region54: #{up_block_forward.1} parent=39 // pred_check_branch
          %283 = sbr.rel (%p281) target = $region56
        $region55: #{up_block_forward.1} parent=39 // pred_region
          %284 = dma.done [#allocation12], 32
        $region56: #{up_block_forward.1} parent=39 // pred_fallthru
          _
        // Predicated region
        $region57: #{up_block_forward.1} parent=39 // pred_check
          %p285 = pneg %p136
        $region58: #{up_block_forward.1} parent=39 // pred_check_branch
          %287 = sbr.rel (%p285) target = $region60
        $region59: #{up_block_forward.1} parent=39 // pred_region
          %288 = dma.done [#allocation12], 64
        $region60: #{up_block_forward.1} parent=39 // pred_fallthru
          _
        %s289 = sand.u32 %s34, 1
        %s290 = scalar_lea.sflag [#allocation6], %s289
        %s291 = sand.u32 %s34, 1
        %s292 = smul.addr %s291, 8
        %s293 = scalar_lea.vmem [#allocation5], %s292
        %p294 = pneg %p47
        %p295 = pneg %p44
        %s296 = sand.u32 %s26, 1
        %s297 = scalar_lea.sflag [#allocation9], %s296
        %s298 = sand.u32 %s60, 1
        %s299 = smul.addr %s298, 8
        %s300 = scalar_lea.vmem [#allocation8], %s299
        %p301 = pneg %p73
        %p302 = pneg %p70
        %p303 = pneg %p94
        %p304 = pneg %p91
        %p305 = pneg %p115
        %p306 = pneg %p112
        %p307 = pneg %p136
        %p308 = pneg %p133
        %p309 = pneg %p162
        %p310 = pneg %p159
        %s311 = sand.u32 %s149, 1
        %s312 = scalar_lea.sflag [#allocation7], %s311
        %s313 = sand.u32 %s149, 1
        %s314 = smul.addr %s313, 12
        %s315 = scalar_lea.vmem [#allocation14], %s314
        %v317 = vlaneseq
        %v318 = vand.u32 %v317, 127
        %v319 = vadd.s32 %v318, 128
        %v320 = vadd.s32 %v318, 256
        %vm321 = vcmp.lt.s32.totalorder %v318, 0
        %v322 = vsub.s32 0, %v318
        %v323 = vsel %vm321, %v322, %v318
        %v324 = vmul.u32.u64.compose %v323, 2863311531
        %v325 = vextract.low.u32 %v324
        %v326 = vextract.high.u32 %v324
        %v327 = vshrl.u32 %v326, 4
        %v328 = vmul.u32 %v327, 24
        %v329 = vsub.s32 %v323, %v328
        %v330 = vsub.s32 0, %v329
        %v331 = vsel %vm321, %v330, %v329
        %vm332 = vcmp.lt.s32.totalorder %v319, 0
        %v333 = vsub.s32 0, %v319
        %v334 = vsel %vm332, %v333, %v319
        %v335 = vmul.u32.u64.compose %v334, 2863311531
        %v336 = vextract.low.u32 %v335
        %v337 = vextract.high.u32 %v335
        %v338 = vshrl.u32 %v337, 4
        %v339 = vmul.u32 %v338, 24
        %v340 = vsub.s32 %v334, %v339
        %v341 = vsub.s32 0, %v340
        %v342 = vsel %vm332, %v341, %v340
        %vm343 = vcmp.lt.s32.totalorder %v320, 0
        %v344 = vsub.s32 0, %v320
        %v345 = vsel %vm343, %v344, %v320
        %v346 = vmul.u32.u64.compose %v345, 2863311531
        %v347 = vextract.low.u32 %v346
        %v348 = vextract.high.u32 %v346
        %v349 = vshrl.u32 %v348, 4
        %v350 = vmul.u32 %v349, 24
        %v351 = vsub.s32 %v345, %v350
        %v352 = vsub.s32 0, %v351
        %v353 = vsel %vm343, %v352, %v351
        %vm354 = vcmp.ne.s32.totalorder %v331, 0
        %vm355 = vcmp.ne.s32.totalorder %v342, 0
        %vm356 = vcmp.ne.s32.totalorder %v353, 0
        %vm357 = vcmp.lt.s32.totalorder %v331, 0
        %vm358 = vcmp.lt.s32.totalorder %v342, 0
        %vm359 = vcmp.lt.s32.totalorder %v353, 0
        %vm360 = vmand %vm357, %vm354
        %vm361 = vmand %vm358, %vm355
        %vm362 = vmand %vm359, %vm356
        %v363 = vadd.s32 %v331, 24
        %v364 = vadd.s32 %v342, 24
        %v365 = vadd.s32 %v353, 24
        %v366 = vsel %vm360, %v363, %v331
        %v367 = vsel %vm361, %v364, %v342
        %v368 = vsel %vm362, %v365, %v353
        %vm369 = vcmp.lt.s32.totalorder %v366, 16
        %vm370 = vcmp.lt.s32.totalorder %v367, 16
        %vm371 = vcmp.lt.s32.totalorder %v368, 16
        %v372 = vsel %vm369, 1, 0
        %v373 = vsel %vm370, 1, 0
        %v374 = vsel %vm371, 1, 0
        %v375 = vcvt.s32.f32 %v372
        %v376 = vcvt.s32.f32 %v373
        %v377 = vcvt.s32.f32 %v374
        %v378 = vld [vmem:[#allocation13] sm:$0xf]
        %v379 = vld [vmem:[#allocation10] sm:$0x3]
        %v380 = vld [vmem:[#allocation11] sm:$0x3]
        %v381 = vld [vmem:[%s263] sm:$0x3f]
        %v383 = vcombine.high %v381, %v381
        %v385 = vunpack.c.l.s4 1983009808
        %v386 = vunpack.c.0.s8 %v385
        %v387 = vlaneseq
        %v388 = vshrl.u32 %v387, 7
        %v389 = vsub.s32 %v386, %v388
        %v390 = vrot.slane %v381, %v389
        %v392 = vunpack.c.l.s4 1983009808
        %v393 = vunpack.c.0.s8 %v392
        %v394 = vlaneseq
        %v395 = vshrl.u32 %v394, 7
        %v396 = vsub.s32 %v393, %v395
        %v397 = vrot.slane %v383, %v396
        %400 = vst [vmem:[#allocation2] sm:$0x33] %v390
        %401 = vst [vmem:[#allocation2 + $0x8] sm:$0x3] %v397
        %v402 = vld [vmem:[%s272] sm:$0x3f]
        %v404 = vcombine.low %v402, %v402
        %v406 = vunpack.c.l.s4 1983009808
        %v407 = vunpack.c.0.s8 %v406
        %v408 = vlaneseq
        %v409 = vshrl.u32 %v408, 7
        %v410 = vsub.s32 %v407, %v409
        %v411 = vrot.slane %v404, %v410
        %v413 = vunpack.c.l.s4 1983009808
        %v414 = vunpack.c.0.s8 %v413
        %v415 = vlaneseq
        %v416 = vshrl.u32 %v415, 7
        %v417 = vsub.s32 %v414, %v416
        %v418 = vrot.slane %v402, %v417
        %421 = vst [vmem:[#allocation2 + $0x30] sm:$0xcc] %v411
        %422 = vst [vmem:[#allocation2 + $0x38] sm:$0xc] %v418
        %v423 = vld [vmem:[%s263] sm:$0xff]
        %v425 = vcombine.low %v423, %v423
        %v427 = vunpack.c.l.s4 1983009808
        %v428 = vunpack.c.0.s8 %v427
        %v429 = vlaneseq
        %v430 = vshrl.u32 %v429, 7
        %v431 = vsub.s32 %v428, %v430
        %v432 = vrot.slane %v425, %v431
        %v434 = vunpack.c.l.s4 1983009808
        %v435 = vunpack.c.0.s8 %v434
        %v436 = vlaneseq
        %v437 = vshrl.u32 %v436, 7
        %v438 = vsub.s32 %v435, %v437
        %v439 = vrot.slane %v423, %v438
        %440 = vrot.lane.b32.xlu0 %v432, 127
        %v441 = vpop.permute.xlu0 %440
        %442 = vrot.lane.b32.xlu0 %v439, 127
        %v443 = vpop.permute.xlu0 %442
        %v444 = vrot.slane %v441, 4
        %v445 = vrot.slane %v443, 4
        %vm446 = vcmask 1043456
        %v447 = vsel %vm446, %v444, %v445
        %vm448 = vcmask 1039360
        %v449 = vsel %vm448, %v441, %v447
        %v450 = vsel %vm448, %v443, %v445
        %453 = vst [vmem:[#allocation2] sm:$0xcc] %v449
        %454 = vst [vmem:[#allocation2 + $0x8] sm:$0xc] %v450
        %v455 = vld [vmem:[%s272] sm:$0xff]
        %v457 = vcombine.high %v455, %v455
        %v459 = vunpack.c.l.s4 1983009808
        %v460 = vunpack.c.0.s8 %v459
        %v461 = vlaneseq
        %v462 = vshrl.u32 %v461, 7
        %v463 = vsub.s32 %v460, %v462
        %v464 = vrot.slane %v455, %v463
        %v466 = vunpack.c.l.s4 1983009808
        %v467 = vunpack.c.0.s8 %v466
        %v468 = vlaneseq
        %v469 = vshrl.u32 %v468, 7
        %v470 = vsub.s32 %v467, %v469
        %v471 = vrot.slane %v457, %v470
        %472 = vrot.lane.b32.xlu0 %v464, 127
        %v473 = vpop.permute.xlu0 %472
        %474 = vrot.lane.b32.xlu0 %v471, 127
        %v475 = vpop.permute.xlu0 %474
        %v476 = vrot.slane %v473, 4
        %v477 = vrot.slane %v475, 4
        %v478 = vsel %vm446, %v476, %v477
        %v479 = vsel %vm448, %v473, %v478
        %v480 = vsel %vm448, %v475, %v477
        %483 = vst [vmem:[#allocation2 + $0x3c] sm:$0x33] %v479
        %484 = vst [vmem:[#allocation2 + $0x44] sm:$0x3] %v480
        %v485 = vld [vmem:[%s263] sm:$0xff]
        %v487 = vcombine.high %v485, %v485
        %v489 = vunpack.c.l.s4 1983009808
        %v490 = vunpack.c.0.s8 %v489
        %v491 = vlaneseq
        %v492 = vshrl.u32 %v491, 7
        %v493 = vsub.s32 %v490, %v492
        %v494 = vrot.slane %v485, %v493
        %v496 = vunpack.c.l.s4 1983009808
        %v497 = vunpack.c.0.s8 %v496
        %v498 = vlaneseq
        %v499 = vshrl.u32 %v498, 7
        %v500 = vsub.s32 %v497, %v499
        %v501 = vrot.slane %v487, %v500
        %502 = vrot.lane.b32.xlu0 %v494, 126
        %v503 = vpop.permute.xlu0 %502
        %504 = vrot.lane.b32.xlu0 %v501, 126
        %v505 = vpop.permute.xlu0 %504
        %v506 = vrot.slane %v503, 4
        %v507 = vrot.slane %v505, 4
        %v508 = vsel %vm446, %v506, %v507
        %vm509 = vcmask 1031168
        %v510 = vsel %vm509, %v503, %v508
        %v511 = vsel %vm509, %v505, %v507
        %514 = vst [vmem:[#allocation2 + $0xc] sm:$0x33] %v510
        %515 = vst [vmem:[#allocation2 + $0x14] sm:$0x3] %v511
        %v516 = vld [vmem:[%s272] sm:$0xff]
        %v518 = vcombine.low %v516, %v516
        %v520 = vunpack.c.l.s4 1983009808
        %v521 = vunpack.c.0.s8 %v520
        %v522 = vlaneseq
        %v523 = vshrl.u32 %v522, 7
        %v524 = vsub.s32 %v521, %v523
        %v525 = vrot.slane %v518, %v524
        %v527 = vunpack.c.l.s4 1983009808
        %v528 = vunpack.c.0.s8 %v527
        %v529 = vlaneseq
        %v530 = vshrl.u32 %v529, 7
        %v531 = vsub.s32 %v528, %v530
        %v532 = vrot.slane %v516, %v531
        %533 = vrot.lane.b32.xlu0 %v525, 126
        %v534 = vpop.permute.xlu0 %533
        %535 = vrot.lane.b32.xlu0 %v532, 126
        %v536 = vpop.permute.xlu0 %535
        %v537 = vrot.slane %v534, 4
        %v538 = vrot.slane %v536, 4
        %v539 = vsel %vm446, %v537, %v538
        %v540 = vsel %vm509, %v534, %v539
        %v541 = vsel %vm509, %v536, %v538
        %544 = vst [vmem:[#allocation2 + $0x3c] sm:$0xcc] %v540
        %545 = vst [vmem:[#allocation2 + $0x44] sm:$0xc] %v541
        %v546 = vld [vmem:[%s263] sm:$0xff]
        %v548 = vcombine.low %v546, %v546
        %v550 = vunpack.c.l.s4 1983009808
        %v551 = vunpack.c.0.s8 %v550
        %v552 = vlaneseq
        %v553 = vshrl.u32 %v552, 7
        %v554 = vsub.s32 %v551, %v553
        %v555 = vrot.slane %v548, %v554
        %v557 = vunpack.c.l.s4 1983009808
        %v558 = vunpack.c.0.s8 %v557
        %v559 = vlaneseq
        %v560 = vshrl.u32 %v559, 7
        %v561 = vsub.s32 %v558, %v560
        %v562 = vrot.slane %v546, %v561
        %563 = vrot.lane.b32.xlu0 %v555, 104
        %v564 = vpop.permute.xlu0 %563
        %565 = vrot.lane.b32.xlu0 %v562, 104
        %v566 = vpop.permute.xlu0 %565
        %v567 = vrot.slane %v564, 4
        %v568 = vrot.slane %v566, 4
        %v569 = vsel %vm446, %v567, %v568
        %vm570 = vcmask 850944
        %v571 = vsel %vm570, %v564, %v569
        %v572 = vsel %vm570, %v566, %v568
        %575 = vst [vmem:[#allocation2 + $0xc] sm:$0xcc] %v571
        %576 = vst [vmem:[#allocation2 + $0x14] sm:$0xc] %v572
        %v577 = vld [vmem:[%s272] sm:$0xff]
        %v579 = vcombine.high %v577, %v577
        %v581 = vunpack.c.l.s4 1983009808
        %v582 = vunpack.c.0.s8 %v581
        %v583 = vlaneseq
        %v584 = vshrl.u32 %v583, 7
        %v585 = vsub.s32 %v582, %v584
        %v586 = vrot.slane %v577, %v585
        %v588 = vunpack.c.l.s4 1983009808
        %v589 = vunpack.c.0.s8 %v588
        %v590 = vlaneseq
        %v591 = vshrl.u32 %v590, 7
        %v592 = vsub.s32 %v589, %v591
        %v593 = vrot.slane %v579, %v592
        %594 = vrot.lane.b32.xlu0 %v586, 104
        %v595 = vpop.permute.xlu0 %594
        %596 = vrot.lane.b32.xlu0 %v593, 104
        %v597 = vpop.permute.xlu0 %596
        %v598 = vrot.slane %v595, 4
        %v599 = vrot.slane %v597, 4
        %v600 = vsel %vm446, %v598, %v599
        %v601 = vsel %vm570, %v595, %v600
        %v602 = vsel %vm570, %v597, %v599
        %605 = vst [vmem:[#allocation2 + $0x48] sm:$0x33] %v601
        %606 = vst [vmem:[#allocation2 + $0x50] sm:$0x3] %v602
        %v607 = vld [vmem:[%s263] sm:$0xff]
        %v609 = vcombine.high %v607, %v607
        %v611 = vunpack.c.l.s4 1983009808
        %v612 = vunpack.c.0.s8 %v611
        %v613 = vlaneseq
        %v614 = vshrl.u32 %v613, 7
        %v615 = vsub.s32 %v612, %v614
        %v616 = vrot.slane %v607, %v615
        %v618 = vunpack.c.l.s4 1983009808
        %v619 = vunpack.c.0.s8 %v618
        %v620 = vlaneseq
        %v621 = vshrl.u32 %v620, 7
        %v622 = vsub.s32 %v619, %v621
        %v623 = vrot.slane %v609, %v622
        %624 = vrot.lane.b32.xlu0 %v616, 103
        %v625 = vpop.permute.xlu0 %624
        %626 = vrot.lane.b32.xlu0 %v623, 103
        %v627 = vpop.permute.xlu0 %626
        %v628 = vrot.slane %v625, 4
        %v629 = vrot.slane %v627, 4
        %v630 = vsel %vm446, %v628, %v629
        %vm631 = vcmask 842752
        %v632 = vsel %vm631, %v625, %v630
        %v633 = vsel %vm631, %v627, %v629
        %636 = vst [vmem:[#allocation2 + $0x18] sm:$0x33] %v632
        %637 = vst [vmem:[#allocation2 + $0x20] sm:$0x3] %v633
        %v638 = vld [vmem:[%s272] sm:$0xff]
        %v640 = vcombine.low %v638, %v638
        %v642 = vunpack.c.l.s4 1983009808
        %v643 = vunpack.c.0.s8 %v642
        %v644 = vlaneseq
        %v645 = vshrl.u32 %v644, 7
        %v646 = vsub.s32 %v643, %v645
        %v647 = vrot.slane %v640, %v646
        %v649 = vunpack.c.l.s4 1983009808
        %v650 = vunpack.c.0.s8 %v649
        %v651 = vlaneseq
        %v652 = vshrl.u32 %v651, 7
        %v653 = vsub.s32 %v650, %v652
        %v654 = vrot.slane %v638, %v653
        %655 = vrot.lane.b32.xlu0 %v647, 103
        %v656 = vpop.permute.xlu0 %655
        %657 = vrot.lane.b32.xlu0 %v654, 103
        %v658 = vpop.permute.xlu0 %657
        %v659 = vrot.slane %v656, 4
        %v660 = vrot.slane %v658, 4
        %v661 = vsel %vm446, %v659, %v660
        %v662 = vsel %vm631, %v656, %v661
        %v663 = vsel %vm631, %v658, %v660
        %666 = vst [vmem:[#allocation2 + $0x48] sm:$0xcc] %v662
        %667 = vst [vmem:[#allocation2 + $0x50] sm:$0xc] %v663
        %v668 = vld [vmem:[%s263] sm:$0xff]
        %v670 = vcombine.low %v668, %v668
        %v672 = vunpack.c.l.s4 1983009808
        %v673 = vunpack.c.0.s8 %v672
        %v674 = vlaneseq
        %v675 = vshrl.u32 %v674, 7
        %v676 = vsub.s32 %v673, %v675
        %v677 = vrot.slane %v670, %v676
        %v679 = vunpack.c.l.s4 1983009808
        %v680 = vunpack.c.0.s8 %v679
        %v681 = vlaneseq
        %v682 = vshrl.u32 %v681, 7
        %v683 = vsub.s32 %v680, %v682
        %v684 = vrot.slane %v668, %v683
        %685 = vrot.lane.b32.xlu0 %v677, 102
        %v686 = vpop.permute.xlu0 %685
        %687 = vrot.lane.b32.xlu0 %v684, 102
        %v688 = vpop.permute.xlu0 %687
        %v689 = vrot.slane %v686, 4
        %v690 = vrot.slane %v688, 4
        %v691 = vsel %vm446, %v689, %v690
        %vm692 = vcmask 834560
        %v693 = vsel %vm692, %v686, %v691
        %v694 = vsel %vm692, %v688, %v690
        %697 = vst [vmem:[#allocation2 + $0x18] sm:$0xcc] %v693
        %698 = vst [vmem:[#allocation2 + $0x20] sm:$0xc] %v694
        %v699 = vld [vmem:[%s272] sm:$0xff]
        %v701 = vcombine.high %v699, %v699
        %v703 = vunpack.c.l.s4 1983009808
        %v704 = vunpack.c.0.s8 %v703
        %v705 = vlaneseq
        %v706 = vshrl.u32 %v705, 7
        %v707 = vsub.s32 %v704, %v706
        %v708 = vrot.slane %v699, %v707
        %v710 = vunpack.c.l.s4 1983009808
        %v711 = vunpack.c.0.s8 %v710
        %v712 = vlaneseq
        %v713 = vshrl.u32 %v712, 7
        %v714 = vsub.s32 %v711, %v713
        %v715 = vrot.slane %v701, %v714
        %716 = vrot.lane.b32.xlu0 %v708, 102
        %v717 = vpop.permute.xlu0 %716
        %718 = vrot.lane.b32.xlu0 %v715, 102
        %v719 = vpop.permute.xlu0 %718
        %v720 = vrot.slane %v717, 4
        %v721 = vrot.slane %v719, 4
        %v722 = vsel %vm446, %v720, %v721
        %v723 = vsel %vm692, %v717, %v722
        %v724 = vsel %vm692, %v719, %v721
        %727 = vst [vmem:[#allocation2 + $0x54] sm:$0x33] %v723
        %728 = vst [vmem:[#allocation2 + $0x5c] sm:$0x3] %v724
        %v729 = vld [vmem:[%s263] sm:$0xff]
        %v731 = vcombine.high %v729, %v729
        %v733 = vunpack.c.l.s4 1983009808
        %v734 = vunpack.c.0.s8 %v733
        %v735 = vlaneseq
        %v736 = vshrl.u32 %v735, 7
        %v737 = vsub.s32 %v734, %v736
        %v738 = vrot.slane %v729, %v737
        %v740 = vunpack.c.l.s4 1983009808
        %v741 = vunpack.c.0.s8 %v740
        %v742 = vlaneseq
        %v743 = vshrl.u32 %v742, 7
        %v744 = vsub.s32 %v741, %v743
        %v745 = vrot.slane %v731, %v744
        %746 = vrot.lane.b32.xlu0 %v738, 80
        %v747 = vpop.permute.xlu0 %746
        %748 = vrot.lane.b32.xlu0 %v745, 80
        %v749 = vpop.permute.xlu0 %748
        %v750 = vrot.slane %v747, 4
        %v751 = vrot.slane %v749, 4
        %v752 = vsel %vm446, %v750, %v751
        %vm753 = vcmask 654336
        %v754 = vsel %vm753, %v747, %v752
        %v755 = vsel %vm753, %v749, %v751
        %758 = vst [vmem:[#allocation2 + $0x24] sm:$0x33] %v754
        %759 = vst [vmem:[#allocation2 + $0x2c] sm:$0x3] %v755
        %v760 = vld [vmem:[%s272] sm:$0xff]
        %v762 = vcombine.low %v760, %v760
        %v764 = vunpack.c.l.s4 1983009808
        %v765 = vunpack.c.0.s8 %v764
        %v766 = vlaneseq
        %v767 = vshrl.u32 %v766, 7
        %v768 = vsub.s32 %v765, %v767
        %v769 = vrot.slane %v762, %v768
        %v771 = vunpack.c.l.s4 1983009808
        %v772 = vunpack.c.0.s8 %v771
        %v773 = vlaneseq
        %v774 = vshrl.u32 %v773, 7
        %v775 = vsub.s32 %v772, %v774
        %v776 = vrot.slane %v760, %v775
        %777 = vrot.lane.b32.xlu0 %v769, 80
        %v778 = vpop.permute.xlu0 %777
        %779 = vrot.lane.b32.xlu0 %v776, 80
        %v780 = vpop.permute.xlu0 %779
        %v781 = vrot.slane %v778, 4
        %v782 = vrot.slane %v780, 4
        %v783 = vsel %vm446, %v781, %v782
        %v784 = vsel %vm753, %v778, %v783
        %v785 = vsel %vm753, %v780, %v782
        %788 = vst [vmem:[#allocation2 + $0x54] sm:$0xcc] %v784
        %789 = vst [vmem:[#allocation2 + $0x5c] sm:$0xc] %v785
        %v790 = vld [vmem:[%s263] sm:$0xff]
        %v792 = vcombine.low %v790, %v790
        %v794 = vunpack.c.l.s4 1983009808
        %v795 = vunpack.c.0.s8 %v794
        %v796 = vlaneseq
        %v797 = vshrl.u32 %v796, 7
        %v798 = vsub.s32 %v795, %v797
        %v799 = vrot.slane %v792, %v798
        %v801 = vunpack.c.l.s4 1983009808
        %v802 = vunpack.c.0.s8 %v801
        %v803 = vlaneseq
        %v804 = vshrl.u32 %v803, 7
        %v805 = vsub.s32 %v802, %v804
        %v806 = vrot.slane %v790, %v805
        %807 = vrot.lane.b32.xlu0 %v799, 79
        %v808 = vpop.permute.xlu0 %807
        %809 = vrot.lane.b32.xlu0 %v806, 79
        %v810 = vpop.permute.xlu0 %809
        %v811 = vrot.slane %v808, 4
        %v812 = vrot.slane %v810, 4
        %v813 = vsel %vm446, %v811, %v812
        %vm814 = vcmask 646144
        %v815 = vsel %vm814, %v808, %v813
        %v816 = vsel %vm814, %v810, %v812
        %819 = vst [vmem:[#allocation2 + $0x24] sm:$0xcc] %v815
        %820 = vst [vmem:[#allocation2 + $0x2c] sm:$0xc] %v816
        %v821 = vld [vmem:[%s272] sm:$0xff]
        %v823 = vcombine.high %v821, %v821
        %v825 = vunpack.c.l.s4 1983009808
        %v826 = vunpack.c.0.s8 %v825
        %v827 = vlaneseq
        %v828 = vshrl.u32 %v827, 7
        %v829 = vsub.s32 %v826, %v828
        %v830 = vrot.slane %v821, %v829
        %v832 = vunpack.c.l.s4 1983009808
        %v833 = vunpack.c.0.s8 %v832
        %v834 = vlaneseq
        %v835 = vshrl.u32 %v834, 7
        %v836 = vsub.s32 %v833, %v835
        %v837 = vrot.slane %v823, %v836
        %838 = vrot.lane.b32.xlu0 %v830, 79
        %v839 = vpop.permute.xlu0 %838
        %840 = vrot.lane.b32.xlu0 %v837, 79
        %v841 = vpop.permute.xlu0 %840
        %v842 = vrot.slane %v839, 4
        %v843 = vrot.slane %v841, 4
        %v844 = vsel %vm446, %v842, %v843
        %v845 = vsel %vm814, %v839, %v844
        %v846 = vsel %vm814, %v841, %v843
        %849 = vst [vmem:[#allocation2 + $0x60] sm:$0x33] %v845
        %850 = vst [vmem:[#allocation2 + $0x68] sm:$0x3] %v846
        %v851 = vld [vmem:[%s263] sm:$0xff]
        %v853 = vcombine.high %v851, %v851
        %v855 = vunpack.c.l.s4 1983009808
        %v856 = vunpack.c.0.s8 %v855
        %v857 = vlaneseq
        %v858 = vshrl.u32 %v857, 7
        %v859 = vsub.s32 %v856, %v858
        %v860 = vrot.slane %v851, %v859
        %v862 = vunpack.c.l.s4 1983009808
        %v863 = vunpack.c.0.s8 %v862
        %v864 = vlaneseq
        %v865 = vshrl.u32 %v864, 7
        %v866 = vsub.s32 %v863, %v865
        %v867 = vrot.slane %v853, %v866
        %868 = vrot.lane.b32.xlu0 %v860, 78
        %v869 = vpop.permute.xlu0 %868
        %870 = vrot.lane.b32.xlu0 %v867, 78
        %v871 = vpop.permute.xlu0 %870
        %v872 = vrot.slane %v869, 4
        %v873 = vrot.slane %v871, 4
        %v874 = vsel %vm446, %v872, %v873
        %vm875 = vcmask 637952
        %v876 = vsel %vm875, %v869, %v874
        %v877 = vsel %vm875, %v871, %v873
        %880 = vst [vmem:[#allocation2 + $0x30] sm:$0x33] %v876
        %881 = vst [vmem:[#allocation2 + $0x38] sm:$0x3] %v877
        %v882 = vld [vmem:[%s272] sm:$0xff]
        %v884 = vcombine.low %v882, %v882
        %v886 = vunpack.c.l.s4 1983009808
        %v887 = vunpack.c.0.s8 %v886
        %v888 = vlaneseq
        %v889 = vshrl.u32 %v888, 7
        %v890 = vsub.s32 %v887, %v889
        %v891 = vrot.slane %v884, %v890
        %v893 = vunpack.c.l.s4 1983009808
        %v894 = vunpack.c.0.s8 %v893
        %v895 = vlaneseq
        %v896 = vshrl.u32 %v895, 7
        %v897 = vsub.s32 %v894, %v896
        %v898 = vrot.slane %v882, %v897
        %899 = vrot.lane.b32.xlu0 %v891, 78
        %v900 = vpop.permute.xlu0 %899
        %901 = vrot.lane.b32.xlu0 %v898, 78
        %v902 = vpop.permute.xlu0 %901
        %v903 = vrot.slane %v900, 4
        %v904 = vrot.slane %v902, 4
        %v905 = vsel %vm446, %v903, %v904
        %v906 = vsel %vm875, %v900, %v905
        %v907 = vsel %vm875, %v902, %v904
        %910 = vst [vmem:[#allocation2 + $0x60] sm:$0xcc] %v906
        %911 = vst [vmem:[#allocation2 + $0x68] sm:$0xc] %v907
        %v912 = vld [vmem:[#allocation2] sm:$0xff]
        %v913 = vld [vmem:[#allocation2 + $0x8] sm:$0xf]
        %v914 = vld [vmem:[#allocation2 + $0xc] sm:$0xff]
        %v915 = vld [vmem:[#allocation2 + $0x14] sm:$0xf]
        %v916 = vld [vmem:[#allocation2 + $0x18] sm:$0xff]
        %v917 = vld [vmem:[#allocation2 + $0x20] sm:$0xf]
        %v918 = vld [vmem:[#allocation2 + $0x24] sm:$0xff]
        %v919 = vld [vmem:[#allocation2 + $0x2c] sm:$0xf]
        %v920 = vld [vmem:[#allocation2 + $0x30] sm:$0xff]
        %v921 = vld [vmem:[#allocation2 + $0x38] sm:$0xf]
        %v922 = vld [vmem:[#allocation2 + $0x3c] sm:$0xff]
        %v923 = vld [vmem:[#allocation2 + $0x44] sm:$0xf]
        %v924 = vld [vmem:[#allocation2 + $0x48] sm:$0xff]
        %v925 = vld [vmem:[#allocation2 + $0x50] sm:$0xf]
        %v926 = vld [vmem:[#allocation2 + $0x54] sm:$0xff]
        %v927 = vld [vmem:[#allocation2 + $0x5c] sm:$0xf]
        %v928 = vld [vmem:[#allocation2 + $0x60] sm:$0xff]
        %v929 = vld [vmem:[#allocation2 + $0x68] sm:$0xf]
        %931 = vset.pattern.permute.xlu0 0
        %932 = vperm.xlu0 %931, %v378
        %v933 = vpop.permute.xlu0 %932
        %v953 = vunpack.c.l.b16 %v912
        %v954 = vunpack.c.h.b16 %v912
        %v955 = vunpack.c.l.b16 %v913
        %v956 = vunpack.c.l.b16 %v914
        %v957 = vunpack.c.h.b16 %v914
        %v958 = vunpack.c.l.b16 %v915
        %v959 = vunpack.c.l.b16 %v916
        %v960 = vunpack.c.h.b16 %v916
        %v961 = vunpack.c.l.b16 %v917
        %v962 = vunpack.c.l.b16 %v918
        %v963 = vunpack.c.h.b16 %v918
        %v964 = vunpack.c.l.b16 %v919
        %v965 = vunpack.c.l.b16 %v920
        %v966 = vunpack.c.h.b16 %v920
        %v967 = vunpack.c.l.b16 %v921
        %v968 = vunpack.c.l.b16 %v922
        %v969 = vunpack.c.h.b16 %v922
        %v970 = vunpack.c.l.b16 %v923
        %v971 = vunpack.c.l.b16 %v924
        %v972 = vunpack.c.h.b16 %v924
        %v973 = vunpack.c.l.b16 %v925
        %v974 = vunpack.c.l.b16 %v926
        %v975 = vunpack.c.h.b16 %v926
        %v976 = vunpack.c.l.b16 %v927
        %v977 = vunpack.c.l.b16 %v928
        %v978 = vunpack.c.h.b16 %v928
        %v979 = vunpack.c.l.b16 %v929
        %v980 = vpack.c.b16 %v956, %v953
        %v981 = vpack.c.b16 %v957, %v954
        %v982 = vpack.c.b16 %v958, %v955
        %v983 = vpack.c.b16 %v962, %v959
        %v984 = vpack.c.b16 %v963, %v960
        %v985 = vpack.c.b16 %v964, %v961
        %v986 = vpack.c.b16 %v968, %v965
        %v987 = vpack.c.b16 %v969, %v966
        %v988 = vpack.c.b16 %v970, %v967
        %v989 = vpack.c.b16 %v974, %v971
        %v990 = vpack.c.b16 %v975, %v972
        %v991 = vpack.c.b16 %v976, %v973
        %v992 = vpack.c.b16 %v977, %v977
        %v993 = vpack.c.b16 %v978, %v978
        %v994 = vpack.c.b16 %v979, %v979
        %vm1007 = vcmask 588800
        %v1009 = vsel %vm1007, %v379, 0
        %vm1011 = vcmask 1043456
        %v1013 = vsel %vm1011, %v992, 0
        %v1016 = vsel %vm1011, %v993, 0
        %v1019 = vsel %vm1011, %v994, 0
        %1021 = vmatprep.subr.bf16.mxu0 %v981
        %1022 = vmatpush1.bf16.msra.mxu0 %v980
        %1023 = vmatprep.subr.bf16.mxu0 %v984
        %1024 = vmatpush1.bf16.msra.mxu0 %v983
        %1025 = vmatprep.subr.bf16.mxu0 %v987
        %1026 = vmatpush1.bf16.msra.mxu0 %v986
        %1027 = vmatprep.subr.bf16.mxu0 %v990
        %1028 = vmatpush1.bf16.msra.mxu0 %v989
        %1029 = vmatprep.subr.bf16.mxu0 %v1016
        %1030 = vmatpush1.bf16.msra.mxu0 %v1013
        %1031 = vmatprep.subr.bf16.mxu0 0
        %1032 = vmatpush1.bf16.msra.mxu0 0
        %1033 = vmatprep.subr.bf16.mxu0 0
        %1034 = vmatpush1.bf16.msra.mxu0 0
        %1035 = vmatprep.subr.bf16.mxu0 0
        %1036 = vmatpush1.bf16.msra.mxu0 0
        %1037 = vmatprep.subr.bf16.mxu0 0
        %1038 = vmatpush1.bf16.msra.mxu0 0
        %1039 = vmatprep.subr.bf16.mxu0 0
        %1040 = vmatpush1.bf16.msra.mxu0 0
        %1041 = vmatprep.subr.bf16.mxu0 0
        %1042 = vmatpush1.bf16.msra.mxu0 0
        %1043 = vmatprep.subr.bf16.mxu0 0
        %1044 = vmatpush1.bf16.msra.mxu0 0
        %1045 = vmatprep.subr.bf16.mxu0 0
        %1046 = vmatpush1.bf16.msra.mxu0 0
        %1047 = vmatprep.subr.bf16.mxu0 0
        %1048 = vmatpush1.bf16.msra.mxu0 0
        %1049 = vmatprep.subr.bf16.mxu0 0
        %1050 = vmatpush1.bf16.msra.mxu0 0
        %1051 = vmatprep.subr.bf16.mxu0 0
        %1052 = vmatpush1.bf16.msra.mxu0 0
        %1053 = vmatprep.mubr.bf16.mxu0 0
        %1054 = vmatmul.mubr.bf16.gmra.mrb[0].mxu0 %v1009
        %v1055 = vpop.f32.mrb[0].mxu0
        %v1056 = vadd.f32 %v933, %v1055
        %v1057 = vpop.f32.mrb[0].mxu0
        %v1058 = vadd.f32 %v933, %v1057
        %v1059 = vpop.f32.mrb[0].mxu0
        %v1060 = vpop.f32.mrb[0].mxu0
        %1061 = vdwg.mxu0
        %1062 = vmatprep.subr.bf16.mxu0 0
        %1063 = vmatpush1.bf16.msra.mxu0 %v982
        %1064 = vmatprep.subr.bf16.mxu0 0
        %1065 = vmatpush1.bf16.msra.mxu0 %v985
        %1066 = vmatprep.subr.bf16.mxu0 0
        %1067 = vmatpush1.bf16.msra.mxu0 %v988
        %1068 = vmatprep.subr.bf16.mxu0 0
        %1069 = vmatpush1.bf16.msra.mxu0 %v991
        %1070 = vmatprep.subr.bf16.mxu0 0
        %1071 = vmatpush1.bf16.msra.mxu0 %v1019
        %1072 = vmatprep.subr.bf16.mxu0 0
        %1073 = vmatpush1.bf16.msra.mxu0 0
        %1074 = vmatprep.subr.bf16.mxu0 0
        %1075 = vmatpush1.bf16.msra.mxu0 0
        %1076 = vmatprep.subr.bf16.mxu0 0
        %1077 = vmatpush1.bf16.msra.mxu0 0
        %1078 = vmatprep.subr.bf16.mxu0 0
        %1079 = vmatpush1.bf16.msra.mxu0 0
        %1080 = vmatprep.subr.bf16.mxu0 0
        %1081 = vmatpush1.bf16.msra.mxu0 0
        %1082 = vmatprep.subr.bf16.mxu0 0
        %1083 = vmatpush1.bf16.msra.mxu0 0
        %1084 = vmatprep.subr.bf16.mxu0 0
        %1085 = vmatpush1.bf16.msra.mxu0 0
        %1086 = vmatprep.subr.bf16.mxu0 0
        %1087 = vmatpush1.bf16.msra.mxu0 0
        %1088 = vmatprep.subr.bf16.mxu0 0
        %1089 = vmatpush1.bf16.msra.mxu0 0
        %1090 = vmatprep.subr.bf16.mxu0 0
        %1091 = vmatpush1.bf16.msra.mxu0 0
        %1092 = vmatprep.subr.bf16.mxu0 0
        %1093 = vmatpush1.bf16.msra.mxu0 0
        %1094 = vmatprep.mubr.bf16.mxu0 0
        %1095 = vmatmul.mubr.bf16.gmra.mrb[0].mxu0 %v1009
        %v1096 = vpop.f32.mrb[0].mxu0
        %v1097 = vadd.f32 %v933, %v1096
        %v1098 = vpop.f32.mrb[0].mxu0
        %v1099 = vpop.f32.mrb[0].mxu0
        %v1100 = vpop.f32.mrb[0].mxu0
        %1101 = vdwg.mxu0
        %v1102 = vmul.f32 %v1056, %v375
        %v1103 = vmul.f32 %v1058, %v376
        %v1104 = vmul.f32 %v1097, %v377
        %v1105 = vsel %vm1011, %v1102, 0.0
        %v1106 = vsel %vm1011, %v1103, 0.0
        %v1107 = vadd.f32 %v1105, %v1106
        %v1108 = vsel %vm1011, %v1104, 0.0
        %v1109 = vadd.f32 %v1107, %v1108
        %1110 = vadd.xlane.f32.xlu0 %v1109
        %v1111 = vpop.xlane.xlu0 %1110
        %v1112 = vrcp.pop 256.0
        %v1113 = vmul.f32 %v1111, %v1112
        %v1114 = vsub.f32 %v1056, %v1113
        %v1115 = vsub.f32 %v1058, %v1113
        %v1116 = vsub.f32 %v1097, %v1113
        %v1117 = vmul.f32 %v1114, %v375
        %v1118 = vmul.f32 %v1115, %v376
        %v1119 = vmul.f32 %v1116, %v377
        %v1120 = vmul.f32 %v1117, %v1117
        %v1121 = vmul.f32 %v1118, %v1118
        %v1122 = vmul.f32 %v1119, %v1119
        %v1123 = vsel %vm1011, %v1120, 0.0
        %v1124 = vsel %vm1011, %v1121, 0.0
        %v1125 = vadd.f32 %v1123, %v1124
        %v1126 = vsel %vm1011, %v1122, 0.0
        %v1127 = vadd.f32 %v1125, %v1126
        %1128 = vadd.xlane.f32.xlu0 %v1127
        %v1129 = vpop.xlane.xlu0 %1128
        %v1130 = vmul.f32 %v1129, %v1112
        %v1131 = vadd.f32 %v1130, 1e-05
        %v1132 = vrsqrt.pop %v1131
        %v1133 = vmul.f32 %v1114, %v1132
        %v1134 = vmul.f32 %v1115, %v1132
        %v1135 = vmul.f32 %v1116, %v1132
        %1136 = vset.pattern.permute.xlu0 1
        %1137 = vperm.xlu0 %1136, %v378
        %v1138 = vpop.permute.xlu0 %1137
        %v1140 = vmul.f32 %v1133, %v1138
        %v1141 = vmul.f32 %v1134, %v1138
        %v1142 = vmul.f32 %v1135, %v1138
        %1143 = vset.pattern.permute.xlu0 2
        %1144 = vperm.xlu0 %1143, %v378
        %v1145 = vpop.permute.xlu0 %1144
        %v1147 = vadd.f32 %v1140, %v1145
        %v1148 = vadd.f32 %v1141, %v1145
        %v1149 = vadd.f32 %v1142, %v1145
        %vm1150 = vcmp.ge.f32.partialorder %v1147, 0.0
        %vm1151 = vcmp.ge.f32.partialorder %v1148, 0.0
        %vm1152 = vcmp.ge.f32.partialorder %v1149, 0.0
        %v1153 = vmul.f32 %v1147, 0.01
        %v1154 = vmul.f32 %v1148, 0.01
        %v1155 = vmul.f32 %v1149, 0.01
        %v1156 = vsel %vm1150, %v1147, %v1153
        %v1157 = vsel %vm1151, %v1148, %v1154
        %v1158 = vsel %vm1152, %v1149, %v1155
        %vm1159 = vcmask 1041408
        %vm1160 = vcmask 1043458
        %vm1161 = vmor %vm1160, %vm1159
        %vm1162 = vcmask 1045508
        %vm1163 = vmor %vm1162, %vm1161
        %vm1164 = vcmask 588806
        %vm1165 = vmor %vm1164, %vm1163
        %1166 = vst.msk [vmem:[#allocation4] sm:$0xff] %vm1165, 0
        %v1167 = vmul.f32 %v1156, %v375
        %v1168 = vmul.f32 %v1157, %v376
        %v1169 = vmul.f32 %v1158, %v377
        %v1170 = vpack.c.bf16 %v1167, %v1167
        %v1171 = vpack.c.bf16 %v1168, %v1168
        %v1172 = vpack.c.bf16 %v1169, %v1169
        %v1176 = vcombine.low %v1170, %v1171
        %v1178 = vunpack.c.l.s4 1983009808
        %v1179 = vunpack.c.0.s8 %v1178
        %v1180 = vlaneseq
        %v1181 = vshrl.u32 %v1180, 7
        %v1182 = vsub.s32 %v1179, %v1181
        %v1183 = vrot.slane %v1176, %v1182
        %v1185 = vunpack.c.l.s4 1983009808
        %v1186 = vunpack.c.0.s8 %v1185
        %v1187 = vlaneseq
        %v1188 = vshrl.u32 %v1187, 7
        %v1189 = vsub.s32 %v1186, %v1188
        %v1190 = vrot.slane %v1172, %v1189
        %v1191 = vcombine.low %v1183, %v1190
        %1192 = vrot.lane.b32.xlu0 %v1191, 25
        %v1193 = vpop.permute.xlu0 %1192
        %v1194 = vrot.slane %v1193, 6
        %vm1195 = vcmask 203776
        %v1196 = vsel %vm1195, %v1194, %v1193
        %vm1198 = vcmask 1041608
        %vm1199 = vmor %vm1160, %vm1198
        %vm1200 = vmor %vm1162, %vm1199
        %vm1201 = vcmask 203782
        %vm1202 = vmor %vm1201, %vm1200
        %1203 = vst.msk [vmem:[#allocation4] sm:$0xff] %vm1202, %v1196
        %v1204 = vld [vmem:[#allocation4] sm:$0x3f]
        %v1206 = vcombine.high %v1204, %v1204
        %v1208 = vunpack.c.l.s4 1983009808
        %v1209 = vunpack.c.0.s8 %v1208
        %v1210 = vlaneseq
        %v1211 = vshrl.u32 %v1210, 7
        %v1212 = vsub.s32 %v1209, %v1211
        %v1213 = vrot.slane %v1204, %v1212
        %v1215 = vunpack.c.l.s4 1983009808
        %v1216 = vunpack.c.0.s8 %v1215
        %v1217 = vlaneseq
        %v1218 = vshrl.u32 %v1217, 7
        %v1219 = vsub.s32 %v1216, %v1218
        %v1220 = vrot.slane %v1206, %v1219
        %1223 = vst [vmem:[#allocation3] sm:$0x33] %v1213
        %1224 = vst [vmem:[#allocation3 + $0x8] sm:$0x3] %v1220
        %v1225 = vld [vmem:[#allocation4] sm:$0xff]
        %v1227 = vcombine.low %v1225, %v1225
        %v1229 = vunpack.c.l.s4 1983009808
        %v1230 = vunpack.c.0.s8 %v1229
        %v1231 = vlaneseq
        %v1232 = vshrl.u32 %v1231, 7
        %v1233 = vsub.s32 %v1230, %v1232
        %v1234 = vrot.slane %v1227, %v1233
        %v1236 = vunpack.c.l.s4 1983009808
        %v1237 = vunpack.c.0.s8 %v1236
        %v1238 = vlaneseq
        %v1239 = vshrl.u32 %v1238, 7
        %v1240 = vsub.s32 %v1237, %v1239
        %v1241 = vrot.slane %v1225, %v1240
        %1242 = vrot.lane.b32.xlu0 %v1234, 127
        %v1243 = vpop.permute.xlu0 %1242
        %1244 = vrot.lane.b32.xlu0 %v1241, 127
        %v1245 = vpop.permute.xlu0 %1244
        %v1246 = vrot.slane %v1243, 4
        %v1247 = vrot.slane %v1245, 4
        %v1248 = vsel %vm446, %v1246, %v1247
        %v1249 = vsel %vm448, %v1243, %v1248
        %v1250 = vsel %vm448, %v1245, %v1247
        %1253 = vst [vmem:[#allocation3] sm:$0xcc] %v1249
        %1254 = vst [vmem:[#allocation3 + $0x8] sm:$0xc] %v1250
        %v1255 = vld [vmem:[#allocation4] sm:$0xff]
        %v1257 = vcombine.high %v1255, %v1255
        %v1259 = vunpack.c.l.s4 1983009808
        %v1260 = vunpack.c.0.s8 %v1259
        %v1261 = vlaneseq
        %v1262 = vshrl.u32 %v1261, 7
        %v1263 = vsub.s32 %v1260, %v1262
        %v1264 = vrot.slane %v1255, %v1263
        %v1266 = vunpack.c.l.s4 1983009808
        %v1267 = vunpack.c.0.s8 %v1266
        %v1268 = vlaneseq
        %v1269 = vshrl.u32 %v1268, 7
        %v1270 = vsub.s32 %v1267, %v1269
        %v1271 = vrot.slane %v1257, %v1270
        %1272 = vrot.lane.b32.xlu0 %v1264, 126
        %v1273 = vpop.permute.xlu0 %1272
        %1274 = vrot.lane.b32.xlu0 %v1271, 126
        %v1275 = vpop.permute.xlu0 %1274
        %v1276 = vrot.slane %v1273, 4
        %v1277 = vrot.slane %v1275, 4
        %v1278 = vsel %vm446, %v1276, %v1277
        %v1279 = vsel %vm509, %v1273, %v1278
        %v1280 = vsel %vm509, %v1275, %v1277
        %1283 = vst [vmem:[#allocation3 + $0xc] sm:$0x33] %v1279
        %1284 = vst [vmem:[#allocation3 + $0x14] sm:$0x3] %v1280
        %v1285 = vld [vmem:[#allocation4] sm:$0xff]
        %v1287 = vcombine.low %v1285, %v1285
        %v1289 = vunpack.c.l.s4 1983009808
        %v1290 = vunpack.c.0.s8 %v1289
        %v1291 = vlaneseq
        %v1292 = vshrl.u32 %v1291, 7
        %v1293 = vsub.s32 %v1290, %v1292
        %v1294 = vrot.slane %v1287, %v1293
        %v1296 = vunpack.c.l.s4 1983009808
        %v1297 = vunpack.c.0.s8 %v1296
        %v1298 = vlaneseq
        %v1299 = vshrl.u32 %v1298, 7
        %v1300 = vsub.s32 %v1297, %v1299
        %v1301 = vrot.slane %v1285, %v1300
        %1302 = vrot.lane.b32.xlu0 %v1294, 104
        %v1303 = vpop.permute.xlu0 %1302
        %1304 = vrot.lane.b32.xlu0 %v1301, 104
        %v1305 = vpop.permute.xlu0 %1304
        %v1306 = vrot.slane %v1303, 4
        %v1307 = vrot.slane %v1305, 4
        %v1308 = vsel %vm446, %v1306, %v1307
        %v1309 = vsel %vm570, %v1303, %v1308
        %v1310 = vsel %vm570, %v1305, %v1307
        %1313 = vst [vmem:[#allocation3 + $0xc] sm:$0xcc] %v1309
        %1314 = vst [vmem:[#allocation3 + $0x14] sm:$0xc] %v1310
        %v1315 = vld [vmem:[#allocation4] sm:$0xff]
        %v1317 = vcombine.high %v1315, %v1315
        %v1319 = vunpack.c.l.s4 1983009808
        %v1320 = vunpack.c.0.s8 %v1319
        %v1321 = vlaneseq
        %v1322 = vshrl.u32 %v1321, 7
        %v1323 = vsub.s32 %v1320, %v1322
        %v1324 = vrot.slane %v1315, %v1323
        %v1326 = vunpack.c.l.s4 1983009808
        %v1327 = vunpack.c.0.s8 %v1326
        %v1328 = vlaneseq
        %v1329 = vshrl.u32 %v1328, 7
        %v1330 = vsub.s32 %v1327, %v1329
        %v1331 = vrot.slane %v1317, %v1330
        %1332 = vrot.lane.b32.xlu0 %v1324, 103
        %v1333 = vpop.permute.xlu0 %1332
        %1334 = vrot.lane.b32.xlu0 %v1331, 103
        %v1335 = vpop.permute.xlu0 %1334
        %v1336 = vrot.slane %v1333, 4
        %v1337 = vrot.slane %v1335, 4
        %v1338 = vsel %vm446, %v1336, %v1337
        %v1339 = vsel %vm631, %v1333, %v1338
        %v1340 = vsel %vm631, %v1335, %v1337
        %1343 = vst [vmem:[#allocation3 + $0x18] sm:$0x33] %v1339
        %1344 = vst [vmem:[#allocation3 + $0x20] sm:$0x3] %v1340
        %v1345 = vld [vmem:[#allocation4] sm:$0xff]
        %v1347 = vcombine.low %v1345, %v1345
        %v1349 = vunpack.c.l.s4 1983009808
        %v1350 = vunpack.c.0.s8 %v1349
        %v1351 = vlaneseq
        %v1352 = vshrl.u32 %v1351, 7
        %v1353 = vsub.s32 %v1350, %v1352
        %v1354 = vrot.slane %v1347, %v1353
        %v1356 = vunpack.c.l.s4 1983009808
        %v1357 = vunpack.c.0.s8 %v1356
        %v1358 = vlaneseq
        %v1359 = vshrl.u32 %v1358, 7
        %v1360 = vsub.s32 %v1357, %v1359
        %v1361 = vrot.slane %v1345, %v1360
        %1362 = vrot.lane.b32.xlu0 %v1354, 102
        %v1363 = vpop.permute.xlu0 %1362
        %1364 = vrot.lane.b32.xlu0 %v1361, 102
        %v1365 = vpop.permute.xlu0 %1364
        %v1366 = vrot.slane %v1363, 4
        %v1367 = vrot.slane %v1365, 4
        %v1368 = vsel %vm446, %v1366, %v1367
        %v1369 = vsel %vm692, %v1363, %v1368
        %v1370 = vsel %vm692, %v1365, %v1367
        %1373 = vst [vmem:[#allocation3 + $0x18] sm:$0xcc] %v1369
        %1374 = vst [vmem:[#allocation3 + $0x20] sm:$0xc] %v1370
        %v1375 = vld [vmem:[#allocation4] sm:$0xff]
        %v1377 = vcombine.high %v1375, %v1375
        %v1379 = vunpack.c.l.s4 1983009808
        %v1380 = vunpack.c.0.s8 %v1379
        %v1381 = vlaneseq
        %v1382 = vshrl.u32 %v1381, 7
        %v1383 = vsub.s32 %v1380, %v1382
        %v1384 = vrot.slane %v1375, %v1383
        %v1386 = vunpack.c.l.s4 1983009808
        %v1387 = vunpack.c.0.s8 %v1386
        %v1388 = vlaneseq
        %v1389 = vshrl.u32 %v1388, 7
        %v1390 = vsub.s32 %v1387, %v1389
        %v1391 = vrot.slane %v1377, %v1390
        %1392 = vrot.lane.b32.xlu0 %v1384, 80
        %v1393 = vpop.permute.xlu0 %1392
        %1394 = vrot.lane.b32.xlu0 %v1391, 80
        %v1395 = vpop.permute.xlu0 %1394
        %v1396 = vrot.slane %v1393, 4
        %v1397 = vrot.slane %v1395, 4
        %v1398 = vsel %vm446, %v1396, %v1397
        %v1399 = vsel %vm753, %v1393, %v1398
        %v1400 = vsel %vm753, %v1395, %v1397
        %1403 = vst [vmem:[#allocation3 + $0x24] sm:$0x33] %v1399
        %1404 = vst [vmem:[#allocation3 + $0x2c] sm:$0x3] %v1400
        %v1405 = vld [vmem:[#allocation4] sm:$0xff]
        %v1407 = vcombine.low %v1405, %v1405
        %v1409 = vunpack.c.l.s4 1983009808
        %v1410 = vunpack.c.0.s8 %v1409
        %v1411 = vlaneseq
        %v1412 = vshrl.u32 %v1411, 7
        %v1413 = vsub.s32 %v1410, %v1412
        %v1414 = vrot.slane %v1407, %v1413
        %v1416 = vunpack.c.l.s4 1983009808
        %v1417 = vunpack.c.0.s8 %v1416
        %v1418 = vlaneseq
        %v1419 = vshrl.u32 %v1418, 7
        %v1420 = vsub.s32 %v1417, %v1419
        %v1421 = vrot.slane %v1405, %v1420
        %1422 = vrot.lane.b32.xlu0 %v1414, 79
        %v1423 = vpop.permute.xlu0 %1422
        %1424 = vrot.lane.b32.xlu0 %v1421, 79
        %v1425 = vpop.permute.xlu0 %1424
        %v1426 = vrot.slane %v1423, 4
        %v1427 = vrot.slane %v1425, 4
        %v1428 = vsel %vm446, %v1426, %v1427
        %v1429 = vsel %vm814, %v1423, %v1428
        %v1430 = vsel %vm814, %v1425, %v1427
        %1433 = vst [vmem:[#allocation3 + $0x24] sm:$0xcc] %v1429
        %1434 = vst [vmem:[#allocation3 + $0x2c] sm:$0xc] %v1430
        %v1435 = vld [vmem:[#allocation4] sm:$0xff]
        %v1437 = vcombine.high %v1435, %v1435
        %v1439 = vunpack.c.l.s4 1983009808
        %v1440 = vunpack.c.0.s8 %v1439
        %v1441 = vlaneseq
        %v1442 = vshrl.u32 %v1441, 7
        %v1443 = vsub.s32 %v1440, %v1442
        %v1444 = vrot.slane %v1435, %v1443
        %v1446 = vunpack.c.l.s4 1983009808
        %v1447 = vunpack.c.0.s8 %v1446
        %v1448 = vlaneseq
        %v1449 = vshrl.u32 %v1448, 7
        %v1450 = vsub.s32 %v1447, %v1449
        %v1451 = vrot.slane %v1437, %v1450
        %1452 = vrot.lane.b32.xlu0 %v1444, 78
        %v1453 = vpop.permute.xlu0 %1452
        %1454 = vrot.lane.b32.xlu0 %v1451, 78
        %v1455 = vpop.permute.xlu0 %1454
        %v1456 = vrot.slane %v1453, 4
        %v1457 = vrot.slane %v1455, 4
        %v1458 = vsel %vm446, %v1456, %v1457
        %v1459 = vsel %vm875, %v1453, %v1458
        %v1460 = vsel %vm875, %v1455, %v1457
        %1463 = vst [vmem:[#allocation3 + $0x30] sm:$0x33] %v1459
        %1464 = vst [vmem:[#allocation3 + $0x38] sm:$0x3] %v1460
        %v1465 = vld [vmem:[#allocation3] sm:$0xff]
        %v1466 = vld [vmem:[#allocation3 + $0x8] sm:$0xf]
        %v1467 = vld [vmem:[#allocation3 + $0xc] sm:$0xff]
        %v1468 = vld [vmem:[#allocation3 + $0x14] sm:$0xf]
        %v1469 = vld [vmem:[#allocation3 + $0x18] sm:$0xff]
        %v1470 = vld [vmem:[#allocation3 + $0x20] sm:$0xf]
        %v1471 = vld [vmem:[#allocation3 + $0x24] sm:$0xff]
        %v1472 = vld [vmem:[#allocation3 + $0x2c] sm:$0xf]
        %v1473 = vld [vmem:[#allocation3 + $0x30] sm:$0x33]
        %v1474 = vld [vmem:[#allocation3 + $0x38] sm:$0x3]
        %1475 = vset.pattern.permute.xlu0 3
        %1476 = vperm.xlu0 %1475, %v378
        %v1477 = vpop.permute.xlu0 %1476
        %v1489 = vunpack.c.l.b16 %v1465
        %v1490 = vunpack.c.h.b16 %v1465
        %v1491 = vunpack.c.l.b16 %v1466
        %v1492 = vunpack.c.l.b16 %v1467
        %v1493 = vunpack.c.h.b16 %v1467
        %v1494 = vunpack.c.l.b16 %v1468
        %v1495 = vunpack.c.l.b16 %v1469
        %v1496 = vunpack.c.h.b16 %v1469
        %v1497 = vunpack.c.l.b16 %v1470
        %v1498 = vunpack.c.l.b16 %v1471
        %v1499 = vunpack.c.h.b16 %v1471
        %v1500 = vunpack.c.l.b16 %v1472
        %v1501 = vunpack.c.l.b16 %v1473
        %v1502 = vunpack.c.h.b16 %v1473
        %v1503 = vunpack.c.l.b16 %v1474
        %v1504 = vpack.c.b16 %v1492, %v1489
        %v1505 = vpack.c.b16 %v1493, %v1490
        %v1506 = vpack.c.b16 %v1494, %v1491
        %v1507 = vpack.c.b16 %v1498, %v1495
        %v1508 = vpack.c.b16 %v1499, %v1496
        %v1509 = vpack.c.b16 %v1500, %v1497
        %v1510 = vpack.c.b16 %v1501, %v1501
        %v1511 = vpack.c.b16 %v1502, %v1502
        %v1512 = vpack.c.b16 %v1503, %v1503
        %vm1519 = vcmask 293888
        %v1521 = vsel %vm1519, %v380, 0
        %v1524 = vsel %vm1159, %v1510, 0
        %v1527 = vsel %vm1159, %v1511, 0
        %v1530 = vsel %vm1159, %v1512, 0
        %1532 = vmatprep.subr.bf16.mxu0 %v1505
        %1533 = vmatpush1.bf16.msra.mxu0 %v1504
        %1534 = vmatprep.subr.bf16.mxu0 %v1508
        %1535 = vmatpush1.bf16.msra.mxu0 %v1507
        %1536 = vmatprep.subr.bf16.mxu0 %v1527
        %1537 = vmatpush1.bf16.msra.mxu0 %v1524
        %1538 = vmatprep.subr.bf16.mxu0 0
        %1539 = vmatpush1.bf16.msra.mxu0 0
        %1540 = vmatprep.subr.bf16.mxu0 0
        %1541 = vmatpush1.bf16.msra.mxu0 0
        %1542 = vmatprep.subr.bf16.mxu0 0
        %1543 = vmatpush1.bf16.msra.mxu0 0
        %1544 = vmatprep.subr.bf16.mxu0 0
        %1545 = vmatpush1.bf16.msra.mxu0 0
        %1546 = vmatprep.subr.bf16.mxu0 0
        %1547 = vmatpush1.bf16.msra.mxu0 0
        %1548 = vmatprep.subr.bf16.mxu0 0
        %1549 = vmatpush1.bf16.msra.mxu0 0
        %1550 = vmatprep.subr.bf16.mxu0 0
        %1551 = vmatpush1.bf16.msra.mxu0 0
        %1552 = vmatprep.subr.bf16.mxu0 0
        %1553 = vmatpush1.bf16.msra.mxu0 0
        %1554 = vmatprep.subr.bf16.mxu0 0
        %1555 = vmatpush1.bf16.msra.mxu0 0
        %1556 = vmatprep.subr.bf16.mxu0 0
        %1557 = vmatpush1.bf16.msra.mxu0 0
        %1558 = vmatprep.subr.bf16.mxu0 0
        %1559 = vmatpush1.bf16.msra.mxu0 0
        %1560 = vmatprep.subr.bf16.mxu0 0
        %1561 = vmatpush1.bf16.msra.mxu0 0
        %1562 = vmatprep.subr.bf16.mxu0 0
        %1563 = vmatpush1.bf16.msra.mxu0 0
        %1564 = vmatprep.mubr.bf16.mxu0 0
        %1565 = vmatmul.mubr.bf16.gmra.mrb[0].mxu0 %v1521
        %v1566 = vpop.f32.mrb[0].mxu0
        %v1567 = vadd.f32 %v1477, %v1566
        %v1568 = vpop.f32.mrb[0].mxu0
        %v1569 = vadd.f32 %v1477, %v1568
        %v1570 = vpop.f32.mrb[0].mxu0
        %v1571 = vpop.f32.mrb[0].mxu0
        %1572 = vdwg.mxu0
        %1573 = vmatprep.subr.bf16.mxu0 0
        %1574 = vmatpush1.bf16.msra.mxu0 %v1506
        %1575 = vmatprep.subr.bf16.mxu0 0
        %1576 = vmatpush1.bf16.msra.mxu0 %v1509
        %1577 = vmatprep.subr.bf16.mxu0 0
        %1578 = vmatpush1.bf16.msra.mxu0 %v1530
        %1579 = vmatprep.subr.bf16.mxu0 0
        %1580 = vmatpush1.bf16.msra.mxu0 0
        %1581 = vmatprep.subr.bf16.mxu0 0
        %1582 = vmatpush1.bf16.msra.mxu0 0
        %1583 = vmatprep.subr.bf16.mxu0 0
        %1584 = vmatpush1.bf16.msra.mxu0 0
        %1585 = vmatprep.subr.bf16.mxu0 0
        %1586 = vmatpush1.bf16.msra.mxu0 0
        %1587 = vmatprep.subr.bf16.mxu0 0
        %1588 = vmatpush1.bf16.msra.mxu0 0
        %1589 = vmatprep.subr.bf16.mxu0 0
        %1590 = vmatpush1.bf16.msra.mxu0 0
        %1591 = vmatprep.subr.bf16.mxu0 0
        %1592 = vmatpush1.bf16.msra.mxu0 0
        %1593 = vmatprep.subr.bf16.mxu0 0
        %1594 = vmatpush1.bf16.msra.mxu0 0
        %1595 = vmatprep.subr.bf16.mxu0 0
        %1596 = vmatpush1.bf16.msra.mxu0 0
        %1597 = vmatprep.subr.bf16.mxu0 0
        %1598 = vmatpush1.bf16.msra.mxu0 0
        %1599 = vmatprep.subr.bf16.mxu0 0
        %1600 = vmatpush1.bf16.msra.mxu0 0
        %1601 = vmatprep.subr.bf16.mxu0 0
        %1602 = vmatpush1.bf16.msra.mxu0 0
        %1603 = vmatprep.subr.bf16.mxu0 0
        %1604 = vmatpush1.bf16.msra.mxu0 0
        %1605 = vmatprep.mubr.bf16.mxu0 0
        %1606 = vmatmul.mubr.bf16.gmra.mrb[0].mxu0 %v1521
        %v1607 = vpop.f32.mrb[0].mxu0
        %v1608 = vadd.f32 %v1477, %v1607
        %v1609 = vpop.f32.mrb[0].mxu0
        %v1610 = vpop.f32.mrb[0].mxu0
        %v1611 = vpop.f32.mrb[0].mxu0
        %1612 = vdwg.mxu0
        %v1613 = vmul.f32 %v1567, %v375
        %v1614 = vmul.f32 %v1569, %v376
        %v1615 = vmul.f32 %v1608, %v377
        %v1616 = vsel %vm1011, %v1613, 0.0
        %v1617 = vsel %vm1011, %v1614, 0.0
        %v1618 = vadd.f32 %v1616, %v1617
        %v1619 = vsel %vm1011, %v1615, 0.0
        %v1620 = vadd.f32 %v1618, %v1619
        %1621 = vadd.xlane.f32.xlu0 %v1620
        %v1622 = vpop.xlane.xlu0 %1621
        %v1623 = vmul.f32 %v1622, %v1112
        %v1624 = vsub.f32 %v1567, %v1623
        %v1625 = vsub.f32 %v1569, %v1623
        %v1626 = vsub.f32 %v1608, %v1623
        %v1627 = vmul.f32 %v1624, %v375
        %v1628 = vmul.f32 %v1625, %v376
        %v1629 = vmul.f32 %v1626, %v377
        %v1630 = vmul.f32 %v1627, %v1627
        %v1631 = vmul.f32 %v1628, %v1628
        %v1632 = vmul.f32 %v1629, %v1629
        %v1633 = vsel %vm1011, %v1630, 0.0
        %v1634 = vsel %vm1011, %v1631, 0.0
        %v1635 = vadd.f32 %v1633, %v1634
        %v1636 = vsel %vm1011, %v1632, 0.0
        %v1637 = vadd.f32 %v1635, %v1636
        %1638 = vadd.xlane.f32.xlu0 %v1637
        %v1639 = vpop.xlane.xlu0 %1638
        %v1640 = vmul.f32 %v1639, %v1112
        %v1641 = vadd.f32 %v1640, 1e-05
        %v1642 = vrsqrt.pop %v1641
        %v1643 = vmul.f32 %v1624, %v1642
        %v1644 = vmul.f32 %v1625, %v1642
        %v1645 = vmul.f32 %v1626, %v1642
        %1646 = vset.pattern.permute.xlu0 4
        %1647 = vperm.xlu0 %1646, %v378
        %v1648 = vpop.permute.xlu0 %1647
        %v1650 = vmul.f32 %v1643, %v1648
        %v1651 = vmul.f32 %v1644, %v1648
        %v1652 = vmul.f32 %v1645, %v1648
        %1653 = vset.pattern.permute.xlu0 5
        %1654 = vperm.xlu0 %1653, %v378
        %v1655 = vpop.permute.xlu0 %1654
        %v1657 = vadd.f32 %v1650, %v1655
        %v1658 = vadd.f32 %v1651, %v1655
        %v1659 = vadd.f32 %v1652, %v1655
        %vm1660 = vcmp.ge.f32.partialorder %v1657, 0.0
        %vm1661 = vcmp.ge.f32.partialorder %v1658, 0.0
        %vm1662 = vcmp.ge.f32.partialorder %v1659, 0.0
        %v1663 = vmul.f32 %v1657, 0.01
        %v1664 = vmul.f32 %v1658, 0.01
        %v1665 = vmul.f32 %v1659, 0.01
        %v1666 = vsel %vm1660, %v1657, %v1663
        %v1667 = vsel %vm1661, %v1658, %v1664
        %v1668 = vsel %vm1662, %v1659, %v1665
        %v1671 = vcombine.low %v1666, %v1667
        %1673 = vst [vmem:[%s315] sm:$0xff] %v1671
        %1674 = vst [vmem:[%s315 + $0x8] sm:$0xf] %v1668
        %s1675 = sand.u32 %s149, 1
        %s1676 = scalar_lea.sflag [#allocation7], %s1675
        %s1677 = sand.u32 %s149, 1
        %s1678 = smul.addr %s1677, 12
        %s1679 = scalar_lea.vmem [#allocation14], %s1678
        // Predicated region
        $region61: #{up_block_forward.1} parent=39 // pred_check
          %p1680 = pneg %p159
        $region62: #{up_block_forward.1} parent=39 // pred_check_branch
          %1682 = sbr.rel (%p1680) target = $region64
        $region63: #{up_block_forward.1} parent=39 // pred_region
          %s1684 = ssub.s32 192, 192
          %1685 = vsyncadd %s1676, %s1684
          %s1686 = smul.addr %s26, 3
          %s1687 = smul.addr %s1686, 64
          %s1688 = scalar_lea.hbm %s5, %s1687
          %s1690 = sshll.u32 %s1679, 4
          %s1691 = int_to_ptr.vmem [resolvable:$true] %s1690
          %1693 = dma.vmem_to_hbm [thread:$0]  %s1691, 192, %s1688, %s1676
        $region64: #{up_block_forward.1} parent=39 // pred_fallthru
          _
      $region40: #{up_block_forward.1} parent=5 // pred_fallthru
        _
      %p1694 = scmp.le.s32.totalorder 2, %s21
      // Predicated region
      $region65: #{up_block_forward.1} parent=5 // pred_check
        %p1695 = pneg %p1694
      $region66: #{up_block_forward.1} parent=5 // pred_check_branch
        %1697 = sbr.rel (%p1695) target = $region68
      $region67: #{up_block_forward.1} parent=5 // pred_region
        %s1698 = ssub.s32 %s21, 2
        // Predicated region
        $region69: #{up_block_forward.1} parent=67 // pred_check
          %p1699 = pneg %p165
        $region70: #{up_block_forward.1} parent=67 // pred_check_branch
          %1701 = sbr.rel (%p1699) target = $region72
        $region71: #{up_block_forward.1} parent=67 // pred_region
          %s1702 = sand.u32 %s150, 1
          %s1703 = scalar_lea.sflag [#allocation7], %s1702
          %s1704 = sand.u32 %s150, 1
          %s1705 = smul.addr %s1704, 12
          %s1706 = scalar_lea.vmem [#allocation14], %s1705
          %1707 = dma.done %s1703, 192
        $region72: #{up_block_forward.1} parent=67 // pred_fallthru
          _
      $region68: #{up_block_forward.1} parent=5 // pred_fallthru
        _
    $region6: #{up_block_forward.1} parent=1 // loop_footer
      %s25 = sadd.s32 1, %s21
    $region7: #{up_block_forward.1} parent=1 // loop_footer_branch
      %20 = sbr.rel target = $region3
    $region8: #{up_block_forward.1} parent=1 // loop_exit
      _
    %1708 = vsyncpa [#allocation6], 1
    %s1709 = scalar_lea.sflag [#allocation6], 1
    %1710 = vsyncpa %s1709, 1
    %1711 = vsyncpa [#allocation9], 1
    %s1712 = scalar_lea.sflag [#allocation9], 1
    %1713 = vsyncpa %s1712, 1
    %1714 = vsyncpa [#allocation12], 1
    %1715 = vsyncpa [#allocation7], 1
    %s1716 = scalar_lea.sflag [#allocation7], 1
    %1717 = vsyncpa %s1716, 1

</llo_original>
